<compile_context>
chip_gen: v6e
topology: v6e:2x2x1
jax: 0.10.0
libtpu: 0.0.40
codegen_flags: <defaults>
</compile_context>

<pallas_src>
import functools
import math

import jax
import jax.numpy as jnp
from jax.experimental import pallas as pl
from jax.experimental.pallas import tpu as pltpu


# ----------------------------- shared math helpers -----------------------------

def _layernorm(x, eps=1e-6):
    # PyTorch LayerNorm(elementwise_affine=False), biased variance, eps=1e-6
    mu = jnp.mean(x, axis=-1, keepdims=True)
    xc = x - mu
    var = jnp.mean(xc * xc, axis=-1, keepdims=True)
    return xc * jax.lax.rsqrt(var + eps)


def _gelu_tanh(x):
    # tanh-approx GELU (EUP tanh); ~5e-4 max abs deviation from exact erf-GELU.
    c = math.sqrt(2.0 / math.pi)
    return 0.5 * x * (1.0 + jnp.tanh(c * (x + 0.044715 * x * x * x)))


# --------------------------------- kernel ---------------------------------------

def dit_perceiver_pooling_kernel(
    query_ref, qln_ref, kv_ref, cond_ref,
    wmod_ref, bmod_ref, wq_ref, bq_ref, wkv_ref, bkv_ref,
    wproj_ref, bproj_ref, wfc1_ref, bfc1_ref, wfc2_ref, bfc2_ref,
    out_ref,
    *, num_heads,
):
    f32 = jnp.float32
    TB, S, D = kv_ref.shape
    Q = query_ref.shape[0]
    H = num_heads
    hd = D // H
    cdt = wq_ref.dtype                                   # MXU input dtype (bf16 default)
    exact_softmax = jnp.dtype(cdt) == jnp.dtype(jnp.float32)

    query = query_ref[...]                               # (Q, D)  f32
    qln = qln_ref[...]                                   # (Q, D)  f32  (LN(query), hoisted)
    cond = cond_ref[...].reshape(TB, D).astype(f32)      # (TB, D)

    # ---- adaLN modulation: Linear(SiLU(cond)) -> 6 chunks ----
    c = cond * jax.lax.logistic(cond)                    # SiLU via EUP sigmoid
    mod = jnp.dot(c.astype(cdt), wmod_ref[...],
                  preferred_element_type=f32) + bmod_ref[...]              # (TB, 6D)
    scale1 = mod[:, 0 * D:1 * D][:, None, :]                               # (TB, 1, D)
    shift1 = mod[:, 1 * D:2 * D][:, None, :]
    gate1 = mod[:, 2 * D:3 * D][:, None, :]
    scale2 = mod[:, 3 * D:4 * D][:, None, :]
    shift2 = mod[:, 4 * D:5 * D][:, None, :]
    gate2 = mod[:, 5 * D:6 * D][:, None, :]

    # ---- Perceiver cross-attention: fused full-width projections ----
    qmod = qln[None] * (scale1 + 1.0) + shift1                             # (TB, Q, D) f32
    qmod2 = qmod.reshape(TB * Q, D).astype(cdt)
    kvn2 = _layernorm(kv_ref[...].astype(f32)).reshape(TB * S, D).astype(cdt)

    q_all = jnp.dot(qmod2, wq_ref[...],
                    preferred_element_type=f32) + bq_ref[...]              # (TB*Q, D)
    kv_all = jnp.dot(kvn2, wkv_ref[...],
                     preferred_element_type=f32) + bkv_ref[...]            # (TB*S, 2D)

    sm_scale = 1.0 / math.sqrt(hd)
    # output-projection bias folded into the head accumulator; each per-head projection
    # is (TB*Q, hd) @ (hd, D) -> full output width, leading-axis weight block.
    attn = jnp.broadcast_to(bproj_ref[...].astype(f32), (TB * Q, D))
    for h in range(H):                                   # static unroll over heads
        lo = h * hd
        q_h = q_all[:, lo:lo + hd].reshape(TB, Q, hd).astype(cdt)
        k_h = kv_all[:, lo:lo + hd].reshape(TB, S, hd).astype(cdt)
        v_h = kv_all[:, D + lo:D + lo + hd].reshape(TB, S, hd).astype(cdt)
        s = jnp.einsum("bqd,bkd->bqk", q_h, k_h,
                       preferred_element_type=f32) * sm_scale              # (TB, Q, S)
        s = s - jnp.max(s, axis=-1, keepdims=True)
        p = jnp.exp(s)
        l = jnp.sum(p, axis=-1, keepdims=True)
        if exact_softmax:
            p = p / l
        else:
            p = p * pl.reciprocal(l, approx=True)
        o_h = jnp.einsum("bqk,bkd->bqd", p.astype(cdt), v_h,
                         preferred_element_type=f32)                       # (TB, Q, hd)
        attn = attn + jnp.dot(o_h.reshape(TB * Q, hd).astype(cdt), wproj_ref[h],
                              preferred_element_type=f32)                  # (TB*Q, D)

    x = query[None] + gate1 * attn.reshape(TB, Q, D)                       # (TB, Q, D)

    # ---- MLP branch ----
    xn = _layernorm(x) * (scale2 + 1.0) + shift2                           # (TB, Q, D)
    hid = jnp.dot(xn.reshape(TB * Q, D).astype(cdt), wfc1_ref[...],
                  preferred_element_type=f32) + bfc1_ref[...]              # (TB*Q, 4D)
    hid = _gelu_tanh(hid)
    mlp = jnp.dot(hid.astype(cdt), wfc2_ref[...],
                  preferred_element_type=f32) + bfc2_ref[...]              # (TB*Q, D)

    out_ref[...] = (x + gate2 * mlp.reshape(TB, Q, D)).astype(out_ref.dtype)


# ------------------------- feature probe & VMEM planning -------------------------

def _probe_copy_kernel(x_ref, o_ref):
    o_ref[...] = x_ref[...] + 1.0


@functools.cache
def _buffered_weights_supported():
    """One-time capability probe: can grid-invariant inputs use pl.Buffered(1)?"""
    try:
        x = jnp.zeros((8, 128), jnp.float32)
        out = pl.pallas_call(
            _probe_copy_kernel,
            out_shape=jax.ShapeDtypeStruct((8, 128), jnp.float32),
            grid_spec=pltpu.PrefetchScalarGridSpec(
                num_scalar_prefetch=0,
                grid=(2,),
                in_specs=[pl.BlockSpec((8, 128), lambda i: (0, 0),
                                       pipeline_mode=pl.Buffered(1))],
                out_specs=pl.BlockSpec((8, 128), lambda i: (0, 0)),
            ),
        )(x)
        jax.block_until_ready(out)
        return True
    except Exception:  # deliberate broad catch: this is a probe on a trivial kernel only
        return False


def _vmem_capacity_bytes(default=64 << 20):
    """Per-core VMEM capacity; conservative (v7x-safe) default if the query fails."""
    try:
        cap = getattr(pltpu.get_tpu_info(), "vmem_capacity_bytes", None)
        return int(cap) if cap else int(default)
    except Exception:   # hardware query unavailable; heuristic fallback only
        return int(default)


def _vmem_plan_bytes(TB, *, S, D, Q, kv_itemsize, cdt_itemsize, out_itemsize, const_bytes):
    """Rough per-grid-step VMEM footprint (blocks + resident weights + live activations)."""
    f32 = 4
    b = 0
    b += 2 * TB * S * D * kv_itemsize            # kv input block (double buffered)
    b += 2 * TB * D * f32                        # cond block
    b += 2 * TB * Q * D * out_itemsize           # output block
    b += 2 * const_bytes                         # weights/query (assume x2-buffered)
    b += TB * S * D * cdt_itemsize               # LayerNorm'd kv (compute dtype)
    b += TB * S * 2 * D * (f32 + cdt_itemsize)   # fused K|V projection (+ per-head casts)
    b += TB * Q * S * 2 * f32                    # per-head scores / probs
    b += TB * Q * D * 4 * f32                    # qmod / q_all / attn / x
    b += TB * Q * 4 * D * f32                    # MLP hidden
    b += TB * 6 * D * f32                        # adaLN chunks
    return int(b)


def _pick_batch_block(B, plan_fn, budget):
    divisors = [d for d in range(1, B + 1) if B % d == 0]
    fit = [d for d in divisors if plan_fn(d) <= budget] or [1]
    # prefer >= 2 grid steps so a 2-TensorCore chip (v7x) shards the parallel axis
    # and input/output DMA overlaps with compute.
    pref = [d for d in fit if B // d >= 2] or fit
    return max(pref)


# ----------------------------------- wrapper -------------------------------------

def dit_perceiver_pooling_block(kv, cond, params, *, num_heads,
                                compute_dtype=jnp.bfloat16, batch_block=None,
                                out_dtype=jnp.float32):
    B, S, D = kv.shape
    query = params["query"]
    Q = query.shape[0]
    H = num_heads
    assert D % H == 0
    hd = D // H

    f32 = jnp.float32
    cdt = jnp.dtype(compute_dtype)
    odt = jnp.dtype(out_dtype)

    # ---- batch-invariant work hoisted out of the kernel ----
    query_f32 = query.astype(f32)
    qln = _layernorm(query_f32)

    operands = {
        "query": query_f32,
        "qln": qln,
        "kv": kv.astype(cdt),                             # streamed at compute precision
        "cond": cond.astype(f32).reshape(B, 1, D),
        "w_mod": params["w_mod"].astype(cdt), "b_mod": params["b_mod"].astype(f32),
        "w_q": params["w_q"].astype(cdt),     "b_q": params["b_q"].astype(f32),
        "w_kv": params["w_kv"].astype(cdt),   "b_kv": params["b_kv"].astype(f32),
        "w_proj": params["w_proj"].reshape(H, hd, D).astype(cdt),   # rows h*hd:(h+1)*hd
        "b_proj": params["b_proj"].astype(f32),
        "w_fc1": params["w_fc1"].astype(cdt), "b_fc1": params["b_fc1"].astype(f32),
        "w_fc2": params["w_fc2"].astype(cdt), "b_fc2": params["b_fc2"].astype(f32),
    }
    order = ("query", "qln", "kv", "cond",
             "w_mod", "b_mod", "w_q", "b_q", "w_kv", "b_kv",
             "w_proj", "b_proj", "w_fc1", "b_fc1", "w_fc2", "b_fc2")
    args = [operands[k] for k in order]
    batched = {"kv", "cond"}
    const_bytes = sum(int(operands[k].size) * operands[k].dtype.itemsize
                      for k in order if k not in batched)

    # ---- generation-aware batch tile + VMEM limit ----
    cap = _vmem_capacity_bytes()
    plan_fn = functools.partial(
        _vmem_plan_bytes, S=S, D=D, Q=Q,
        kv_itemsize=cdt.itemsize, cdt_itemsize=cdt.itemsize,
        out_itemsize=odt.itemsize, const_bytes=const_bytes)
    TB = batch_block if batch_block is not None else _pick_batch_block(B, plan_fn, int(0.7 * cap))
    assert B % TB == 0, (B, TB)
    nb = B // TB
    vmem_limit = int(min(0.9 * cap, max(1.25 * plan_fn(TB) + (8 << 20), 32 << 20)))

    # ---- BlockSpecs ----
    single_buffer = _buffered_weights_supported()

    def const_spec(name):
        shape = operands[name].shape
        index_map = lambda b, _n=len(shape): (0,) * _n
        if single_buffer:
            return pl.BlockSpec(shape, index_map, pipeline_mode=pl.Buffered(1))
        return pl.BlockSpec(shape, index_map)

    in_specs = []
    for name in order:
        if name == "kv":
            in_specs.append(pl.BlockSpec((TB, S, D), lambda b: (b, 0, 0)))
        elif name == "cond":
            in_specs.append(pl.BlockSpec((TB, 1, D), lambda b: (b, 0, 0)))
        else:
            in_specs.append(const_spec(name))

    # ---- advisory cost estimate so XLA schedules well around the custom call ----
    flops = 2 * B * (6 * D * D            # adaLN modulation
                     + Q * D * D          # Q projection
                     + 2 * S * D * D      # fused K|V projection
                     + 2 * Q * S * D      # scores + P@V
                     + Q * D * D          # output projection
                     + 8 * Q * D * D)     # MLP
    transcendentals = B * (D + H * Q * S + 4 * Q * D)
    bytes_accessed = (const_bytes + B * S * D * cdt.itemsize
                      + B * D * 4 + B * Q * D * odt.itemsize)
    cost = pl.CostEstimate(flops=int(flops), transcendentals=int(transcendentals),
                           bytes_accessed=int(bytes_accessed))

    return pl.pallas_call(
        functools.partial(dit_perceiver_pooling_kernel, num_heads=num_heads),
        out_shape=jax.ShapeDtypeStruct((B, Q, D), odt),
        grid_spec=pltpu.PrefetchScalarGridSpec(
            num_scalar_prefetch=0,
            grid=(nb,),
            in_specs=in_specs,
            out_specs=pl.BlockSpec((TB, Q, D), lambda b: (b, 0, 0)),
        ),
        compiler_params=pltpu.CompilerParams(
            dimension_semantics=("parallel",),
            vmem_limit_bytes=vmem_limit),
        cost_estimate=cost,
    )(*args)


# --------------------------- pure-JAX reference (check) ---------------------------

def ref_forward(kv, cond, p, num_heads):
    B, S, D = kv.shape
    hd = D // num_heads

    def ln(x, eps=1e-6):
        mu = jnp.mean(x, axis=-1, keepdims=True)
        xc = x - mu
        return xc * jax.lax.rsqrt(jnp.mean(xc * xc, axis=-1, keepdims=True) + eps)

    query = jnp.broadcast_to(p["query"][None], (B,) + p["query"].shape)          # (B, Q, D)
    mod = jax.nn.silu(cond) @ p["w_mod"] + p["b_mod"]                            # (B, 6D)
    scale1, shift1, gate1, scale2, shift2, gate2 = jnp.split(mod, 6, axis=-1)

    qn = ln(query) * (scale1[:, None] + 1.0) + shift1[:, None]
    kvn = ln(kv)
    qh = qn @ p["w_q"] + p["b_q"]
    kvh = kvn @ p["w_kv"] + p["b_kv"]
    k, v = kvh[..., :D], kvh[..., D:]
    q4 = qh.reshape(B, -1, num_heads, hd)
    k4 = k.reshape(B, S, num_heads, hd)
    v4 = v.reshape(B, S, num_heads, hd)
    s = jnp.einsum("bqhd,bkhd->bhqk", q4, k4) / math.sqrt(hd)
    pa = jax.nn.softmax(s, axis=-1)
    o = jnp.einsum("bhqk,bkhd->bqhd", pa, v4).reshape(B, -1, D)
    o = o @ p["w_proj"] + p["b_proj"]
    x = query + gate1[:, None] * o
    xn = ln(x) * (scale2[:, None] + 1.0) + shift2[:, None]
    h = jax.nn.gelu(xn @ p["w_fc1"] + p["b_fc1"], approximate=False)
    mlp = h @ p["w_fc2"] + p["b_fc2"]
    return x + gate2[:, None] * mlp


# ------------------------------------- main ---------------------------------------

if __name__ == "__main__":
    B, S, D = 2, 16, 32           # batch, kv sequence length, dim
    num_heads, Q = 4, 8           # heads, num_query_tokens

    key = jax.random.PRNGKey(0)
    ks = jax.random.split(key, 15)

    def tn(k, shape, std):
        return (std * jax.random.truncated_normal(k, -2.0, 2.0, shape)).astype(jnp.float32)

    # nn.Linear weights stored as (in, out), i.e. already transposed vs PyTorch (out, in).
    params = {
        "query":  tn(ks[0], (Q, D), 1.0),                  # trunc_normal_ (mean0std1)
        "w_mod":  tn(ks[1], (D, 6 * D), 0.02), "b_mod":  tn(ks[2], (1, 6 * D), 0.02),
        "w_q":    tn(ks[3], (D, D), 0.02),     "b_q":    tn(ks[4], (1, D), 0.02),
        "w_kv":   tn(ks[5], (D, 2 * D), 0.02), "b_kv":   tn(ks[6], (1, 2 * D), 0.02),
        "w_proj": tn(ks[7], (D, D), 0.02),     "b_proj": tn(ks[8], (1, D), 0.02),
        "w_fc1":  tn(ks[9], (D, 4 * D), 0.02), "b_fc1":  tn(ks[10], (1, 4 * D), 0.02),
        "w_fc2":  tn(ks[11], (4 * D, D), 0.02), "b_fc2": tn(ks[12], (1, D), 0.02),
    }
    kv = jax.random.normal(ks[13], (B, S, D), jnp.float32)
    cond = jax.random.normal(ks[14], (B, D), jnp.float32)

    ref = ref_forward(kv, cond, params, num_heads)

    # f32 compute path: tight parity vs the exact f32 reference (exact softmax divide)
    out_f32 = dit_perceiver_pooling_block(kv, cond, params, num_heads=num_heads,
                                          compute_dtype=jnp.float32)
    out_f32 = jax.block_until_ready(out_f32)
    assert out_f32.shape == (B, Q, D), out_f32.shape
    err_f32 = float(jnp.max(jnp.abs(out_f32 - ref)))
    assert err_f32 < 2e-3, f"f32 mismatch vs reference: {err_f32}"

    # default bf16 compute path (MXU-native rate, bf16 kv streaming); relaxed tolerance
    out_bf16 = dit_perceiver_pooling_block(kv, cond, params, num_heads=num_heads)
    out_bf16 = jax.block_until_ready(out_bf16)
    err_bf16 = float(jnp.max(jnp.abs(out_bf16 - ref)))
    assert err_bf16 < 3e-2, f"bf16 mismatch vs reference: {err_bf16}"

    print("KERNEL_OK")
</pallas_src>

<mosaic_0001>
module attributes {stable_mosaic.version = 11 : i64} {
  func.func @_probe_copy_kernel(%arg0: i32, %arg1: memref<8x128xf32, #tpu.memory_space<vmem>>, %arg2: memref<8x128xf32, #tpu.memory_space<vmem>>) attributes {dimension_semantics = [#tpu.dimension_semantics<arbitrary>], iteration_bounds = array<i64: 2>, scalar_prefetch = 0 : i64, scratch_operands = 0 : i64, tpu.core_type = #tpu.core_type<tc>, window_params = [{pipeline_mode = #tpu.pipeline_mode<synchronous>, transform_indices = @transform_0, window_bounds = array<i64: 8, 128>}, {pipeline_mode = #tpu.pipeline_mode<synchronous>, transform_indices = @transform_1, window_bounds = array<i64: 8, 128>}]} {
    %c0 = arith.constant 0 : index
    %c0_0 = arith.constant 0 : index
    %0 = vector.load %arg1[%c0, %c0_0] : memref<8x128xf32, #tpu.memory_space<vmem>>, vector<8x128xf32>
    %cst = arith.constant 1.000000e+00 : f32
    %1 = vector.broadcast %cst : f32 to vector<8x128xf32>
    %2 = arith.addf %0, %1 : vector<8x128xf32>
    %c0_1 = arith.constant 0 : index
    %c0_2 = arith.constant 0 : index
    %3 = vector.load %arg2[%c0_1, %c0_2] : memref<8x128xf32, #tpu.memory_space<vmem>>, vector<8x128xf32>
    tpu.vector_store %arg2[%c0_1, %c0_2], %2 {strides = array<i32>} : memref<8x128xf32, #tpu.memory_space<vmem>>, vector<8x128xf32>,
    return
  }
  func.func @transform_0(%arg0: i32) -> (i32, i32) {
    %c0_i32 = arith.constant 0 : i32
    %c0_i32_0 = arith.constant 0 : i32
    %c0_i32_1 = arith.constant 0 : i32
    return %c0_i32, %c0_i32_0 : i32, i32
  }
  func.func @transform_1(%arg0: i32) -> (i32, i32) {
    %c0_i32 = arith.constant 0 : i32
    %c0_i32_0 = arith.constant 0 : i32
    %c0_i32_1 = arith.constant 0 : i32
    return %c0_i32, %c0_i32_0 : i32, i32
  }
}

module attributes {stable_mosaic.version = 11 : i64} {
  func.func @dit_perceiver_pooling_kernel(%arg0: i32, %arg1: memref<8x32xf32, #tpu.memory_space<vmem>>, %arg2: memref<8x32xf32, #tpu.memory_space<vmem>>, %arg3: memref<1x16x32xf32, #tpu.memory_space<vmem>>, %arg4: memref<1x1x32xf32, #tpu.memory_space<vmem>>, %arg5: memref<32x192xf32, #tpu.memory_space<vmem>>, %arg6: memref<1x192xf32, #tpu.memory_space<vmem>>, %arg7: memref<32x32xf32, #tpu.memory_space<vmem>>, %arg8: memref<1x32xf32, #tpu.memory_space<vmem>>, %arg9: memref<32x64xf32, #tpu.memory_space<vmem>>, %arg10: memref<1x64xf32, #tpu.memory_space<vmem>>, %arg11: memref<4x8x32xf32, #tpu.memory_space<vmem>>, %arg12: memref<1x32xf32, #tpu.memory_space<vmem>>, %arg13: memref<32x128xf32, #tpu.memory_space<vmem>>, %arg14: memref<1x128xf32, #tpu.memory_space<vmem>>, %arg15: memref<128x32xf32, #tpu.memory_space<vmem>>, %arg16: memref<1x32xf32, #tpu.memory_space<vmem>>, %arg17: memref<1x8x32xf32, #tpu.memory_space<vmem>>) attributes {dimension_semantics = [#tpu.dimension_semantics<parallel>], iteration_bounds = array<i64: 2>, scalar_prefetch = 0 : i64, scratch_operands = 0 : i64, tpu.core_type = #tpu.core_type<tc>, window_params = [{pipeline_mode = #tpu.pipeline_mode<synchronous>, transform_indices = @transform_0, window_bounds = array<i64: 8, 32>}, {pipeline_mode = #tpu.pipeline_mode<synchronous>, transform_indices = @transform_1, window_bounds = array<i64: 8, 32>}, {transform_indices = @transform_2, window_bounds = array<i64: 1, 16, 32>}, {transform_indices = @transform_3, window_bounds = array<i64: 1, 1, 32>}, {pipeline_mode = #tpu.pipeline_mode<synchronous>, transform_indices = @transform_4, window_bounds = array<i64: 32, 192>}, {pipeline_mode = #tpu.pipeline_mode<synchronous>, transform_indices = @transform_5, window_bounds = array<i64: 1, 192>}, {pipeline_mode = #tpu.pipeline_mode<synchronous>, transform_indices = @transform_6, window_bounds = array<i64: 32, 32>}, {pipeline_mode = #tpu.pipeline_mode<synchronous>, transform_indices = @transform_7, window_bounds = array<i64: 1, 32>}, {pipeline_mode = #tpu.pipeline_mode<synchronous>, transform_indices = @transform_8, window_bounds = array<i64: 32, 64>}, {pipeline_mode = #tpu.pipeline_mode<synchronous>, transform_indices = @transform_9, window_bounds = array<i64: 1, 64>}, {pipeline_mode = #tpu.pipeline_mode<synchronous>, transform_indices = @transform_10, window_bounds = array<i64: 4, 8, 32>}, {pipeline_mode = #tpu.pipeline_mode<synchronous>, transform_indices = @transform_11, window_bounds = array<i64: 1, 32>}, {pipeline_mode = #tpu.pipeline_mode<synchronous>, transform_indices = @transform_12, window_bounds = array<i64: 32, 128>}, {pipeline_mode = #tpu.pipeline_mode<synchronous>, transform_indices = @transform_13, window_bounds = array<i64: 1, 128>}, {pipeline_mode = #tpu.pipeline_mode<synchronous>, transform_indices = @transform_14, window_bounds = array<i64: 128, 32>}, {pipeline_mode = #tpu.pipeline_mode<synchronous>, transform_indices = @transform_15, window_bounds = array<i64: 1, 32>}, {transform_indices = @transform_16, window_bounds = array<i64: 1, 8, 32>}]} {
    %c0 = arith.constant 0 : index
    %c0_0 = arith.constant 0 : index
    %0 = vector.load %arg1[%c0, %c0_0] : memref<8x32xf32, #tpu.memory_space<vmem>>, vector<8x32xf32>
    %c0_1 = arith.constant 0 : index
    %c0_2 = arith.constant 0 : index
    %1 = vector.load %arg2[%c0_1, %c0_2] : memref<8x32xf32, #tpu.memory_space<vmem>>, vector<8x32xf32>
    %c0_3 = arith.constant 0 : index
    %c0_4 = arith.constant 0 : index
    %c0_5 = arith.constant 0 : index
    %2 = vector.load %arg4[%c0_3, %c0_4, %c0_5] : memref<1x1x32xf32, #tpu.memory_space<vmem>>, vector<1x1x32xf32>
    %3 = vector.shape_cast %2 : vector<1x1x32xf32> to vector<1x32xf32>
    %4 = arith.negf %3 : vector<1x32xf32>
    %5 = math.exp %4 : vector<1x32xf32>
    %cst = arith.constant 1.000000e+00 : f32
    %6 = vector.broadcast %cst : f32 to vector<1x32xf32>
    %7 = arith.addf %6, %5 : vector<1x32xf32>
    %8 = arith.divf %6, %7 : vector<1x32xf32>
    %9 = arith.mulf %3, %8 : vector<1x32xf32>
    %c0_6 = arith.constant 0 : index
    %c0_7 = arith.constant 0 : index
    %10 = vector.load %arg5[%c0_6, %c0_7] : memref<32x192xf32, #tpu.memory_space<vmem>>, vector<32x192xf32>
    %cst_8 = arith.constant dense<0.000000e+00> : vector<1x192xf32>
    %11 = tpu.matmul %9, %10, %cst_8 {dimension_numbers = #tpu.dot_dimension_numbers<[1], [0], [0], [1], [0, 0, 1, 1], [], []>} : vector<1x32xf32>, vector<32x192xf32>, vector<1x192xf32> -> vector<1x192xf32>
    %c0_9 = arith.constant 0 : index
    %c0_10 = arith.constant 0 : index
    %12 = vector.load %arg6[%c0_9, %c0_10] : memref<1x192xf32, #tpu.memory_space<vmem>>, vector<1x192xf32>
    %13 = arith.addf %11, %12 : vector<1x192xf32>
    %14 = vector.extract_strided_slice %13 {offsets = [0, 0], sizes = [1, 32], strides = [1, 1]} : vector<1x192xf32> to vector<1x32xf32>
    %15 = vector.shape_cast %14 : vector<1x32xf32> to vector<1x1x32xf32>
    %16 = vector.extract_strided_slice %13 {offsets = [0, 32], sizes = [1, 32], strides = [1, 1]} : vector<1x192xf32> to vector<1x32xf32>
    %17 = vector.shape_cast %16 : vector<1x32xf32> to vector<1x1x32xf32>
    %18 = vector.extract_strided_slice %13 {offsets = [0, 64], sizes = [1, 32], strides = [1, 1]} : vector<1x192xf32> to vector<1x32xf32>
    %19 = vector.shape_cast %18 : vector<1x32xf32> to vector<1x1x32xf32>
    %20 = vector.extract_strided_slice %13 {offsets = [0, 96], sizes = [1, 32], strides = [1, 1]} : vector<1x192xf32> to vector<1x32xf32>
    %21 = vector.shape_cast %20 : vector<1x32xf32> to vector<1x1x32xf32>
    %22 = vector.extract_strided_slice %13 {offsets = [0, 128], sizes = [1, 32], strides = [1, 1]} : vector<1x192xf32> to vector<1x32xf32>
    %23 = vector.shape_cast %22 : vector<1x32xf32> to vector<1x1x32xf32>
    %24 = vector.extract_strided_slice %13 {offsets = [0, 160], sizes = [1, 32], strides = [1, 1]} : vector<1x192xf32> to vector<1x32xf32>
    %25 = vector.shape_cast %24 : vector<1x32xf32> to vector<1x1x32xf32>
    %26 = vector.shape_cast %1 : vector<8x32xf32> to vector<1x8x32xf32>
    %cst_11 = arith.constant 1.000000e+00 : f32
    %27 = vector.broadcast %cst_11 : f32 to vector<1x1x32xf32>
    %28 = arith.addf %15, %27 : vector<1x1x32xf32>
    %29 = vector.broadcast %28 : vector<1x1x32xf32> to vector<1x8x32xf32>
    %30 = arith.mulf %26, %29 : vector<1x8x32xf32>
    %31 = vector.broadcast %17 : vector<1x1x32xf32> to vector<1x8x32xf32>
    %32 = arith.addf %30, %31 : vector<1x8x32xf32>
    %33 = vector.shape_cast %32 : vector<1x8x32xf32> to vector<8x32xf32>
    %c0_12 = arith.constant 0 : index
    %c0_13 = arith.constant 0 : index
    %c0_14 = arith.constant 0 : index
    %34 = vector.load %arg3[%c0_12, %c0_13, %c0_14] : memref<1x16x32xf32, #tpu.memory_space<vmem>>, vector<1x16x32xf32>
    %cst_15 = arith.constant dense<0.000000e+00> : vector<1x16xf32>
    %35 = vector.multi_reduction <add>, %34, %cst_15 [2] : vector<1x16x32xf32> to vector<1x16xf32>
    %36 = vector.shape_cast %35 : vector<1x16xf32> to vector<1x16x1xf32>
    %cst_16 = arith.constant 3.200000e+01 : f32
    %37 = vector.broadcast %cst_16 : f32 to vector<1x16x1xf32>
    %38 = arith.divf %36, %37 : vector<1x16x1xf32>
    %39 = vector.broadcast %38 : vector<1x16x1xf32> to vector<1x16x32xf32>
    %40 = arith.subf %34, %39 : vector<1x16x32xf32>
    %41 = arith.mulf %40, %40 : vector<1x16x32xf32>
    %cst_17 = arith.constant dense<0.000000e+00> : vector<1x16xf32>
    %42 = vector.multi_reduction <add>, %41, %cst_17 [2] : vector<1x16x32xf32> to vector<1x16xf32>
    %43 = vector.shape_cast %42 : vector<1x16xf32> to vector<1x16x1xf32>
    %cst_18 = arith.constant 3.200000e+01 : f32
    %44 = vector.broadcast %cst_18 : f32 to vector<1x16x1xf32>
    %45 = arith.divf %43, %44 : vector<1x16x1xf32>
    %cst_19 = arith.constant 9.99999997E-7 : f32
    %46 = vector.broadcast %cst_19 : f32 to vector<1x16x1xf32>
    %47 = arith.addf %45, %46 : vector<1x16x1xf32>
    %48 = math.rsqrt %47 : vector<1x16x1xf32>
    %49 = vector.broadcast %48 : vector<1x16x1xf32> to vector<1x16x32xf32>
    %50 = arith.mulf %40, %49 : vector<1x16x32xf32>
    %51 = vector.shape_cast %50 : vector<1x16x32xf32> to vector<16x32xf32>
    %c0_20 = arith.constant 0 : index
    %c0_21 = arith.constant 0 : index
    %52 = vector.load %arg7[%c0_20, %c0_21] : memref<32x32xf32, #tpu.memory_space<vmem>>, vector<32x32xf32>
    %cst_22 = arith.constant dense<0.000000e+00> : vector<8x32xf32>
    %53 = tpu.matmul %33, %52, %cst_22 {dimension_numbers = #tpu.dot_dimension_numbers<[1], [0], [0], [1], [0, 0, 1, 1], [], []>} : vector<8x32xf32>, vector<32x32xf32>, vector<8x32xf32> -> vector<8x32xf32>
    %c0_23 = arith.constant 0 : index
    %c0_24 = arith.constant 0 : index
    %54 = vector.load %arg8[%c0_23, %c0_24] : memref<1x32xf32, #tpu.memory_space<vmem>>, vector<1x32xf32>
    %55 = vector.broadcast %54 : vector<1x32xf32> to vector<8x32xf32>
    %56 = arith.addf %53, %55 : vector<8x32xf32>
    %c0_25 = arith.constant 0 : index
    %c0_26 = arith.constant 0 : index
    %57 = vector.load %arg9[%c0_25, %c0_26] : memref<32x64xf32, #tpu.memory_space<vmem>>, vector<32x64xf32>
    %cst_27 = arith.constant dense<0.000000e+00> : vector<16x64xf32>
    %58 = tpu.matmul %51, %57, %cst_27 {dimension_numbers = #tpu.dot_dimension_numbers<[1], [0], [0], [1], [0, 0, 1, 1], [], []>} : vector<16x32xf32>, vector<32x64xf32>, vector<16x64xf32> -> vector<16x64xf32>
    %c0_28 = arith.constant 0 : index
    %c0_29 = arith.constant 0 : index
    %59 = vector.load %arg10[%c0_28, %c0_29] : memref<1x64xf32, #tpu.memory_space<vmem>>, vector<1x64xf32>
    %60 = vector.broadcast %59 : vector<1x64xf32> to vector<16x64xf32>
    %61 = arith.addf %58, %60 : vector<16x64xf32>
    %c0_30 = arith.constant 0 : index
    %c0_31 = arith.constant 0 : index
    %62 = vector.load %arg12[%c0_30, %c0_31] : memref<1x32xf32, #tpu.memory_space<vmem>>, vector<1x32xf32>
    %63 = vector.shape_cast %62 : vector<1x32xf32> to vector<1x32xf32>
    %64 = vector.broadcast %63 : vector<1x32xf32> to vector<8x32xf32>
    %65 = vector.extract_strided_slice %56 {offsets = [0, 0], sizes = [8, 8], strides = [1, 1]} : vector<8x32xf32> to vector<8x8xf32>
    %66 = vector.shape_cast %65 : vector<8x8xf32> to vector<1x8x8xf32>
    %67 = vector.extract_strided_slice %61 {offsets = [0, 0], sizes = [16, 8], strides = [1, 1]} : vector<16x64xf32> to vector<16x8xf32>
    %68 = vector.shape_cast %67 : vector<16x8xf32> to vector<1x16x8xf32>
    %69 = vector.extract_strided_slice %61 {offsets = [0, 32], sizes = [16, 8], strides = [1, 1]} : vector<16x64xf32> to vector<16x8xf32>
    %70 = vector.shape_cast %69 : vector<16x8xf32> to vector<1x16x8xf32>
    "tpu.trace_start"() <{level = 10 : i32, message = "bqd,bkd->bqk"}> : () -> ()
    %cst_32 = arith.constant dense<0.000000e+00> : vector<1x8x16xf32>
    %71 = tpu.matmul %66, %68, %cst_32 {dimension_numbers = #tpu.dot_dimension_numbers<[2], [2], [1], [1], [0, 0, 0, 1, 1, 1], [0], [0]>} : vector<1x8x8xf32>, vector<1x16x8xf32>, vector<1x8x16xf32> -> vector<1x8x16xf32>
    "tpu.trace_stop"() : () -> ()
    %cst_33 = arith.constant 0.353553385 : f32
    %72 = vector.broadcast %cst_33 : f32 to vector<1x8x16xf32>
    %73 = arith.mulf %71, %72 : vector<1x8x16xf32>
    %cst_34 = arith.constant dense<0xFF800000> : vector<1x8xf32>
    %74 = vector.multi_reduction <maximumf>, %73, %cst_34 [2] : vector<1x8x16xf32> to vector<1x8xf32>
    %75 = vector.shape_cast %74 : vector<1x8xf32> to vector<1x8x1xf32>
    %76 = vector.broadcast %75 : vector<1x8x1xf32> to vector<1x8x16xf32>
    %77 = arith.subf %73, %76 : vector<1x8x16xf32>
    %78 = math.exp %77 : vector<1x8x16xf32>
    %cst_35 = arith.constant dense<0.000000e+00> : vector<1x8xf32>
    %79 = vector.multi_reduction <add>, %78, %cst_35 [2] : vector<1x8x16xf32> to vector<1x8xf32>
    %80 = vector.shape_cast %79 : vector<1x8xf32> to vector<1x8x1xf32>
    %81 = vector.broadcast %80 : vector<1x8x1xf32> to vector<1x8x16xf32>
    %82 = arith.divf %78, %81 : vector<1x8x16xf32>
    "tpu.trace_start"() <{level = 10 : i32, message = "bqk,bkd->bqd"}> : () -> ()
    %cst_36 = arith.constant dense<0.000000e+00> : vector<1x8x8xf32>
    %83 = tpu.matmul %82, %70, %cst_36 {dimension_numbers = #tpu.dot_dimension_numbers<[2], [1], [1], [2], [0, 0, 0, 1, 1, 2], [0], [0]>} : vector<1x8x16xf32>, vector<1x16x8xf32>, vector<1x8x8xf32> -> vector<1x8x8xf32>
    "tpu.trace_stop"() : () -> ()
    %84 = vector.shape_cast %83 : vector<1x8x8xf32> to vector<8x8xf32>
    %c0_37 = arith.constant 0 : index
    %c0_38 = arith.constant 0 : index
    %c0_39 = arith.constant 0 : index
    %85 = vector.load %arg11[%c0_37, %c0_38, %c0_39] : memref<4x8x32xf32, #tpu.memory_space<vmem>>, vector<1x8x32xf32>
    %86 = vector.shape_cast %85 : vector<1x8x32xf32> to vector<8x32xf32>
    %cst_40 = arith.constant dense<0.000000e+00> : vector<8x32xf32>
    %87 = tpu.matmul %84, %86, %cst_40 {dimension_numbers = #tpu.dot_dimension_numbers<[1], [0], [0], [1], [0, 0, 1, 1], [], []>} : vector<8x8xf32>, vector<8x32xf32>, vector<8x32xf32> -> vector<8x32xf32>
    %88 = arith.addf %64, %87 : vector<8x32xf32>
    %89 = vector.extract_strided_slice %56 {offsets = [0, 8], sizes = [8, 8], strides = [1, 1]} : vector<8x32xf32> to vector<8x8xf32>
    %90 = vector.shape_cast %89 : vector<8x8xf32> to vector<1x8x8xf32>
    %91 = vector.extract_strided_slice %61 {offsets = [0, 8], sizes = [16, 8], strides = [1, 1]} : vector<16x64xf32> to vector<16x8xf32>
    %92 = vector.shape_cast %91 : vector<16x8xf32> to vector<1x16x8xf32>
    %93 = vector.extract_strided_slice %61 {offsets = [0, 40], sizes = [16, 8], strides = [1, 1]} : vector<16x64xf32> to vector<16x8xf32>
    %94 = vector.shape_cast %93 : vector<16x8xf32> to vector<1x16x8xf32>
    "tpu.trace_start"() <{level = 10 : i32, message = "bqd,bkd->bqk"}> : () -> ()
    %cst_41 = arith.constant dense<0.000000e+00> : vector<1x8x16xf32>
    %95 = tpu.matmul %90, %92, %cst_41 {dimension_numbers = #tpu.dot_dimension_numbers<[2], [2], [1], [1], [0, 0, 0, 1, 1, 1], [0], [0]>} : vector<1x8x8xf32>, vector<1x16x8xf32>, vector<1x8x16xf32> -> vector<1x8x16xf32>
    "tpu.trace_stop"() : () -> ()
    %cst_42 = arith.constant 0.353553385 : f32
    %96 = vector.broadcast %cst_42 : f32 to vector<1x8x16xf32>
    %97 = arith.mulf %95, %96 : vector<1x8x16xf32>
    %cst_43 = arith.constant dense<0xFF800000> : vector<1x8xf32>
    %98 = vector.multi_reduction <maximumf>, %97, %cst_43 [2] : vector<1x8x16xf32> to vector<1x8xf32>
    %99 = vector.shape_cast %98 : vector<1x8xf32> to vector<1x8x1xf32>
    %100 = vector.broadcast %99 : vector<1x8x1xf32> to vector<1x8x16xf32>
    %101 = arith.subf %97, %100 : vector<1x8x16xf32>
    %102 = math.exp %101 : vector<1x8x16xf32>
    %cst_44 = arith.constant dense<0.000000e+00> : vector<1x8xf32>
    %103 = vector.multi_reduction <add>, %102, %cst_44 [2] : vector<1x8x16xf32> to vector<1x8xf32>
    %104 = vector.shape_cast %103 : vector<1x8xf32> to vector<1x8x1xf32>
    %105 = vector.broadcast %104 : vector<1x8x1xf32> to vector<1x8x16xf32>
    %106 = arith.divf %102, %105 : vector<1x8x16xf32>
    "tpu.trace_start"() <{level = 10 : i32, message = "bqk,bkd->bqd"}> : () -> ()
    %cst_45 = arith.constant dense<0.000000e+00> : vector<1x8x8xf32>
    %107 = tpu.matmul %106, %94, %cst_45 {dimension_numbers = #tpu.dot_dimension_numbers<[2], [1], [1], [2], [0, 0, 0, 1, 1, 2], [0], [0]>} : vector<1x8x16xf32>, vector<1x16x8xf32>, vector<1x8x8xf32> -> vector<1x8x8xf32>
    "tpu.trace_stop"() : () -> ()
    %108 = vector.shape_cast %107 : vector<1x8x8xf32> to vector<8x8xf32>
    %c1 = arith.constant 1 : index
    %c0_46 = arith.constant 0 : index
    %c0_47 = arith.constant 0 : index
    %109 = vector.load %arg11[%c1, %c0_46, %c0_47] : memref<4x8x32xf32, #tpu.memory_space<vmem>>, vector<1x8x32xf32>
    %110 = vector.shape_cast %109 : vector<1x8x32xf32> to vector<8x32xf32>
    %cst_48 = arith.constant dense<0.000000e+00> : vector<8x32xf32>
    %111 = tpu.matmul %108, %110, %cst_48 {dimension_numbers = #tpu.dot_dimension_numbers<[1], [0], [0], [1], [0, 0, 1, 1], [], []>} : vector<8x8xf32>, vector<8x32xf32>, vector<8x32xf32> -> vector<8x32xf32>
    %112 = arith.addf %88, %111 : vector<8x32xf32>
    %113 = vector.extract_strided_slice %56 {offsets = [0, 16], sizes = [8, 8], strides = [1, 1]} : vector<8x32xf32> to vector<8x8xf32>
    %114 = vector.shape_cast %113 : vector<8x8xf32> to vector<1x8x8xf32>
    %115 = vector.extract_strided_slice %61 {offsets = [0, 16], sizes = [16, 8], strides = [1, 1]} : vector<16x64xf32> to vector<16x8xf32>
    %116 = vector.shape_cast %115 : vector<16x8xf32> to vector<1x16x8xf32>
    %117 = vector.extract_strided_slice %61 {offsets = [0, 48], sizes = [16, 8], strides = [1, 1]} : vector<16x64xf32> to vector<16x8xf32>
    %118 = vector.shape_cast %117 : vector<16x8xf32> to vector<1x16x8xf32>
    "tpu.trace_start"() <{level = 10 : i32, message = "bqd,bkd->bqk"}> : () -> ()
    %cst_49 = arith.constant dense<0.000000e+00> : vector<1x8x16xf32>
    %119 = tpu.matmul %114, %116, %cst_49 {dimension_numbers = #tpu.dot_dimension_numbers<[2], [2], [1], [1], [0, 0, 0, 1, 1, 1], [0], [0]>} : vector<1x8x8xf32>, vector<1x16x8xf32>, vector<1x8x16xf32> -> vector<1x8x16xf32>
    "tpu.trace_stop"() : () -> ()
    %cst_50 = arith.constant 0.353553385 : f32
    %120 = vector.broadcast %cst_50 : f32 to vector<1x8x16xf32>
    %121 = arith.mulf %119, %120 : vector<1x8x16xf32>
    %cst_51 = arith.constant dense<0xFF800000> : vector<1x8xf32>
    %122 = vector.multi_reduction <maximumf>, %121, %cst_51 [2] : vector<1x8x16xf32> to vector<1x8xf32>
    %123 = vector.shape_cast %122 : vector<1x8xf32> to vector<1x8x1xf32>
    %124 = vector.broadcast %123 : vector<1x8x1xf32> to vector<1x8x16xf32>
    %125 = arith.subf %121, %124 : vector<1x8x16xf32>
    %126 = math.exp %125 : vector<1x8x16xf32>
    %cst_52 = arith.constant dense<0.000000e+00> : vector<1x8xf32>
    %127 = vector.multi_reduction <add>, %126, %cst_52 [2] : vector<1x8x16xf32> to vector<1x8xf32>
    %128 = vector.shape_cast %127 : vector<1x8xf32> to vector<1x8x1xf32>
    %129 = vector.broadcast %128 : vector<1x8x1xf32> to vector<1x8x16xf32>
    %130 = arith.divf %126, %129 : vector<1x8x16xf32>
    "tpu.trace_start"() <{level = 10 : i32, message = "bqk,bkd->bqd"}> : () -> ()
    %cst_53 = arith.constant dense<0.000000e+00> : vector<1x8x8xf32>
    %131 = tpu.matmul %130, %118, %cst_53 {dimension_numbers = #tpu.dot_dimension_numbers<[2], [1], [1], [2], [0, 0, 0, 1, 1, 2], [0], [0]>} : vector<1x8x16xf32>, vector<1x16x8xf32>, vector<1x8x8xf32> -> vector<1x8x8xf32>
    "tpu.trace_stop"() : () -> ()
    %132 = vector.shape_cast %131 : vector<1x8x8xf32> to vector<8x8xf32>
    %c2 = arith.constant 2 : index
    %c0_54 = arith.constant 0 : index
    %c0_55 = arith.constant 0 : index
    %133 = vector.load %arg11[%c2, %c0_54, %c0_55] : memref<4x8x32xf32, #tpu.memory_space<vmem>>, vector<1x8x32xf32>
    %134 = vector.shape_cast %133 : vector<1x8x32xf32> to vector<8x32xf32>
    %cst_56 = arith.constant dense<0.000000e+00> : vector<8x32xf32>
    %135 = tpu.matmul %132, %134, %cst_56 {dimension_numbers = #tpu.dot_dimension_numbers<[1], [0], [0], [1], [0, 0, 1, 1], [], []>} : vector<8x8xf32>, vector<8x32xf32>, vector<8x32xf32> -> vector<8x32xf32>
    %136 = arith.addf %112, %135 : vector<8x32xf32>
    %137 = vector.extract_strided_slice %56 {offsets = [0, 24], sizes = [8, 8], strides = [1, 1]} : vector<8x32xf32> to vector<8x8xf32>
    %138 = vector.shape_cast %137 : vector<8x8xf32> to vector<1x8x8xf32>
    %139 = vector.extract_strided_slice %61 {offsets = [0, 24], sizes = [16, 8], strides = [1, 1]} : vector<16x64xf32> to vector<16x8xf32>
    %140 = vector.shape_cast %139 : vector<16x8xf32> to vector<1x16x8xf32>
    %141 = vector.extract_strided_slice %61 {offsets = [0, 56], sizes = [16, 8], strides = [1, 1]} : vector<16x64xf32> to vector<16x8xf32>
    %142 = vector.shape_cast %141 : vector<16x8xf32> to vector<1x16x8xf32>
    "tpu.trace_start"() <{level = 10 : i32, message = "bqd,bkd->bqk"}> : () -> ()
    %cst_57 = arith.constant dense<0.000000e+00> : vector<1x8x16xf32>
    %143 = tpu.matmul %138, %140, %cst_57 {dimension_numbers = #tpu.dot_dimension_numbers<[2], [2], [1], [1], [0, 0, 0, 1, 1, 1], [0], [0]>} : vector<1x8x8xf32>, vector<1x16x8xf32>, vector<1x8x16xf32> -> vector<1x8x16xf32>
    "tpu.trace_stop"() : () -> ()
    %cst_58 = arith.constant 0.353553385 : f32
    %144 = vector.broadcast %cst_58 : f32 to vector<1x8x16xf32>
    %145 = arith.mulf %143, %144 : vector<1x8x16xf32>
    %cst_59 = arith.constant dense<0xFF800000> : vector<1x8xf32>
    %146 = vector.multi_reduction <maximumf>, %145, %cst_59 [2] : vector<1x8x16xf32> to vector<1x8xf32>
    %147 = vector.shape_cast %146 : vector<1x8xf32> to vector<1x8x1xf32>
    %148 = vector.broadcast %147 : vector<1x8x1xf32> to vector<1x8x16xf32>
    %149 = arith.subf %145, %148 : vector<1x8x16xf32>
    %150 = math.exp %149 : vector<1x8x16xf32>
    %cst_60 = arith.constant dense<0.000000e+00> : vector<1x8xf32>
    %151 = vector.multi_reduction <add>, %150, %cst_60 [2] : vector<1x8x16xf32> to vector<1x8xf32>
    %152 = vector.shape_cast %151 : vector<1x8xf32> to vector<1x8x1xf32>
    %153 = vector.broadcast %152 : vector<1x8x1xf32> to vector<1x8x16xf32>
    %154 = arith.divf %150, %153 : vector<1x8x16xf32>
    "tpu.trace_start"() <{level = 10 : i32, message = "bqk,bkd->bqd"}> : () -> ()
    %cst_61 = arith.constant dense<0.000000e+00> : vector<1x8x8xf32>
    %155 = tpu.matmul %154, %142, %cst_61 {dimension_numbers = #tpu.dot_dimension_numbers<[2], [1], [1], [2], [0, 0, 0, 1, 1, 2], [0], [0]>} : vector<1x8x16xf32>, vector<1x16x8xf32>, vector<1x8x8xf32> -> vector<1x8x8xf32>
    "tpu.trace_stop"() : () -> ()
    %156 = vector.shape_cast %155 : vector<1x8x8xf32> to vector<8x8xf32>
    %c3 = arith.constant 3 : index
    %c0_62 = arith.constant 0 : index
    %c0_63 = arith.constant 0 : index
    %157 = vector.load %arg11[%c3, %c0_62, %c0_63] : memref<4x8x32xf32, #tpu.memory_space<vmem>>, vector<1x8x32xf32>
    %158 = vector.shape_cast %157 : vector<1x8x32xf32> to vector<8x32xf32>
    %cst_64 = arith.constant dense<0.000000e+00> : vector<8x32xf32>
    %159 = tpu.matmul %156, %158, %cst_64 {dimension_numbers = #tpu.dot_dimension_numbers<[1], [0], [0], [1], [0, 0, 1, 1], [], []>} : vector<8x8xf32>, vector<8x32xf32>, vector<8x32xf32> -> vector<8x32xf32>
    %160 = arith.addf %136, %159 : vector<8x32xf32>
    %161 = vector.shape_cast %0 : vector<8x32xf32> to vector<1x8x32xf32>
    %162 = vector.shape_cast %160 : vector<8x32xf32> to vector<1x8x32xf32>
    %163 = vector.broadcast %19 : vector<1x1x32xf32> to vector<1x8x32xf32>
    %164 = arith.mulf %163, %162 : vector<1x8x32xf32>
    %165 = arith.addf %161, %164 : vector<1x8x32xf32>
    %cst_65 = arith.constant dense<0.000000e+00> : vector<1x8xf32>
    %166 = vector.multi_reduction <add>, %165, %cst_65 [2] : vector<1x8x32xf32> to vector<1x8xf32>
    %167 = vector.shape_cast %166 : vector<1x8xf32> to vector<1x8x1xf32>
    %cst_66 = arith.constant 3.200000e+01 : f32
    %168 = vector.broadcast %cst_66 : f32 to vector<1x8x1xf32>
    %169 = arith.divf %167, %168 : vector<1x8x1xf32>
    %170 = vector.broadcast %169 : vector<1x8x1xf32> to vector<1x8x32xf32>
    %171 = arith.subf %165, %170 : vector<1x8x32xf32>
    %172 = arith.mulf %171, %171 : vector<1x8x32xf32>
    %cst_67 = arith.constant dense<0.000000e+00> : vector<1x8xf32>
    %173 = vector.multi_reduction <add>, %172, %cst_67 [2] : vector<1x8x32xf32> to vector<1x8xf32>
    %174 = vector.shape_cast %173 : vector<1x8xf32> to vector<1x8x1xf32>
    %cst_68 = arith.constant 3.200000e+01 : f32
    %175 = vector.broadcast %cst_68 : f32 to vector<1x8x1xf32>
    %176 = arith.divf %174, %175 : vector<1x8x1xf32>
    %cst_69 = arith.constant 9.99999997E-7 : f32
    %177 = vector.broadcast %cst_69 : f32 to vector<1x8x1xf32>
    %178 = arith.addf %176, %177 : vector<1x8x1xf32>
    %179 = math.rsqrt %178 : vector<1x8x1xf32>
    %180 = vector.broadcast %179 : vector<1x8x1xf32> to vector<1x8x32xf32>
    %181 = arith.mulf %171, %180 : vector<1x8x32xf32>
    %cst_70 = arith.constant 1.000000e+00 : f32
    %182 = vector.broadcast %cst_70 : f32 to vector<1x1x32xf32>
    %183 = arith.addf %21, %182 : vector<1x1x32xf32>
    %184 = vector.broadcast %183 : vector<1x1x32xf32> to vector<1x8x32xf32>
    %185 = arith.mulf %181, %184 : vector<1x8x32xf32>
    %186 = vector.broadcast %23 : vector<1x1x32xf32> to vector<1x8x32xf32>
    %187 = arith.addf %185, %186 : vector<1x8x32xf32>
    %188 = vector.shape_cast %187 : vector<1x8x32xf32> to vector<8x32xf32>
    %c0_71 = arith.constant 0 : index
    %c0_72 = arith.constant 0 : index
    %189 = vector.load %arg13[%c0_71, %c0_72] : memref<32x128xf32, #tpu.memory_space<vmem>>, vector<32x128xf32>
    %cst_73 = arith.constant dense<0.000000e+00> : vector<8x128xf32>
    %190 = tpu.matmul %188, %189, %cst_73 {dimension_numbers = #tpu.dot_dimension_numbers<[1], [0], [0], [1], [0, 0, 1, 1], [], []>} : vector<8x32xf32>, vector<32x128xf32>, vector<8x128xf32> -> vector<8x128xf32>
    %c0_74 = arith.constant 0 : index
    %c0_75 = arith.constant 0 : index
    %191 = vector.load %arg14[%c0_74, %c0_75] : memref<1x128xf32, #tpu.memory_space<vmem>>, vector<1x128xf32>
    %192 = vector.broadcast %191 : vector<1x128xf32> to vector<8x128xf32>
    %193 = arith.addf %190, %192 : vector<8x128xf32>
    %cst_76 = arith.constant 5.000000e-01 : f32
    %194 = vector.broadcast %cst_76 : f32 to vector<8x128xf32>
    %195 = arith.mulf %194, %193 : vector<8x128xf32>
    %cst_77 = arith.constant 4.471500e-02 : f32
    %196 = vector.broadcast %cst_77 : f32 to vector<8x128xf32>
    %197 = arith.mulf %196, %193 : vector<8x128xf32>
    %198 = arith.mulf %197, %193 : vector<8x128xf32>
    %199 = arith.mulf %198, %193 : vector<8x128xf32>
    %200 = arith.addf %193, %199 : vector<8x128xf32>
    %cst_78 = arith.constant 0.797884583 : f32
    %201 = vector.broadcast %cst_78 : f32 to vector<8x128xf32>
    %202 = arith.mulf %201, %200 : vector<8x128xf32>
    %203 = math.tanh %202 : vector<8x128xf32>
    %cst_79 = arith.constant 1.000000e+00 : f32
    %204 = vector.broadcast %cst_79 : f32 to vector<8x128xf32>
    %205 = arith.addf %204, %203 : vector<8x128xf32>
    %206 = arith.mulf %195, %205 : vector<8x128xf32>
    %c0_80 = arith.constant 0 : index
    %c0_81 = arith.constant 0 : index
    %207 = vector.load %arg15[%c0_80, %c0_81] : memref<128x32xf32, #tpu.memory_space<vmem>>, vector<128x32xf32>
    %cst_82 = arith.constant dense<0.000000e+00> : vector<8x32xf32>
    %208 = tpu.matmul %206, %207, %cst_82 {dimension_numbers = #tpu.dot_dimension_numbers<[1], [0], [0], [1], [0, 0, 1, 1], [], []>} : vector<8x128xf32>, vector<128x32xf32>, vector<8x32xf32> -> vector<8x32xf32>
    %c0_83 = arith.constant 0 : index
    %c0_84 = arith.constant 0 : index
    %209 = vector.load %arg16[%c0_83, %c0_84] : memref<1x32xf32, #tpu.memory_space<vmem>>, vector<1x32xf32>
    %210 = vector.broadcast %209 : vector<1x32xf32> to vector<8x32xf32>
    %211 = arith.addf %208, %210 : vector<8x32xf32>
    %212 = vector.shape_cast %211 : vector<8x32xf32> to vector<1x8x32xf32>
    %213 = vector.broadcast %25 : vector<1x1x32xf32> to vector<1x8x32xf32>
    %214 = arith.mulf %213, %212 : vector<1x8x32xf32>
    %215 = arith.addf %165, %214 : vector<1x8x32xf32>
    %c0_85 = arith.constant 0 : index
    %c0_86 = arith.constant 0 : index
    %c0_87 = arith.constant 0 : index
    %216 = vector.load %arg17[%c0_85, %c0_86, %c0_87] : memref<1x8x32xf32, #tpu.memory_space<vmem>>, vector<1x8x32xf32>
    tpu.vector_store %arg17[%c0_85, %c0_86, %c0_87], %215 {strides = array<i32>} : memref<1x8x32xf32, #tpu.memory_space<vmem>>, vector<1x8x32xf32>,
    return
  }
  func.func @transform_0(%arg0: i32) -> (i32, i32) {
    %c0_i32 = arith.constant 0 : i32
    %c0_i32_0 = arith.constant 0 : i32
    %c0_i32_1 = arith.constant 0 : i32
    return %c0_i32, %c0_i32_0 : i32, i32
  }
  func.func @transform_1(%arg0: i32) -> (i32, i32) {
    %c0_i32 = arith.constant 0 : i32
    %c0_i32_0 = arith.constant 0 : i32
    %c0_i32_1 = arith.constant 0 : i32
    return %c0_i32, %c0_i32_0 : i32, i32
  }
  func.func @transform_2(%arg0: i32) -> (i32, i32, i32) {
    %c0_i32 = arith.constant 0 : i32
    %c0_i32_0 = arith.constant 0 : i32
    %c0_i32_1 = arith.constant 0 : i32
    return %arg0, %c0_i32, %c0_i32_0 : i32, i32, i32
  }
  func.func @transform_3(%arg0: i32) -> (i32, i32, i32) {
    %c0_i32 = arith.constant 0 : i32
    %c0_i32_0 = arith.constant 0 : i32
    %c0_i32_1 = arith.constant 0 : i32
    return %arg0, %c0_i32, %c0_i32_0 : i32, i32, i32
  }
  func.func @transform_4(%arg0: i32) -> (i32, i32) {
    %c0_i32 = arith.constant 0 : i32
    %c0_i32_0 = arith.constant 0 : i32
    %c0_i32_1 = arith.constant 0 : i32
    return %c0_i32, %c0_i32_0 : i32, i32
  }
  func.func @transform_5(%arg0: i32) -> (i32, i32) {
    %c0_i32 = arith.constant 0 : i32
    %c0_i32_0 = arith.constant 0 : i32
    %c0_i32_1 = arith.constant 0 : i32
    return %c0_i32, %c0_i32_0 : i32, i32
  }
  func.func @transform_6(%arg0: i32) -> (i32, i32) {
    %c0_i32 = arith.constant 0 : i32
    %c0_i32_0 = arith.constant 0 : i32
    %c0_i32_1 = arith.constant 0 : i32
    return %c0_i32, %c0_i32_0 : i32, i32
  }
  func.func @transform_7(%arg0: i32) -> (i32, i32) {
    %c0_i32 = arith.constant 0 : i32
    %c0_i32_0 = arith.constant 0 : i32
    %c0_i32_1 = arith.constant 0 : i32
    return %c0_i32, %c0_i32_0 : i32, i32
  }
  func.func @transform_8(%arg0: i32) -> (i32, i32) {
    %c0_i32 = arith.constant 0 : i32
    %c0_i32_0 = arith.constant 0 : i32
    %c0_i32_1 = arith.constant 0 : i32
    return %c0_i32, %c0_i32_0 : i32, i32
  }
  func.func @transform_9(%arg0: i32) -> (i32, i32) {
    %c0_i32 = arith.constant 0 : i32
    %c0_i32_0 = arith.constant 0 : i32
    %c0_i32_1 = arith.constant 0 : i32
    return %c0_i32, %c0_i32_0 : i32, i32
  }
  func.func @transform_10(%arg0: i32) -> (i32, i32, i32) {
    %c0_i32 = arith.constant 0 : i32
    %c0_i32_0 = arith.constant 0 : i32
    %c0_i32_1 = arith.constant 0 : i32
    %c0_i32_2 = arith.constant 0 : i32
    return %c0_i32, %c0_i32_0, %c0_i32_1 : i32, i32, i32
  }
  func.func @transform_11(%arg0: i32) -> (i32, i32) {
    %c0_i32 = arith.constant 0 : i32
    %c0_i32_0 = arith.constant 0 : i32
    %c0_i32_1 = arith.constant 0 : i32
    return %c0_i32, %c0_i32_0 : i32, i32
  }
  func.func @transform_12(%arg0: i32) -> (i32, i32) {
    %c0_i32 = arith.constant 0 : i32
    %c0_i32_0 = arith.constant 0 : i32
    %c0_i32_1 = arith.constant 0 : i32
    return %c0_i32, %c0_i32_0 : i32, i32
  }
  func.func @transform_13(%arg0: i32) -> (i32, i32) {
    %c0_i32 = arith.constant 0 : i32
    %c0_i32_0 = arith.constant 0 : i32
    %c0_i32_1 = arith.constant 0 : i32
    return %c0_i32, %c0_i32_0 : i32, i32
  }
  func.func @transform_14(%arg0: i32) -> (i32, i32) {
    %c0_i32 = arith.constant 0 : i32
    %c0_i32_0 = arith.constant 0 : i32
    %c0_i32_1 = arith.constant 0 : i32
    return %c0_i32, %c0_i32_0 : i32, i32
  }
  func.func @transform_15(%arg0: i32) -> (i32, i32) {
    %c0_i32 = arith.constant 0 : i32
    %c0_i32_0 = arith.constant 0 : i32
    %c0_i32_1 = arith.constant 0 : i32
    return %c0_i32, %c0_i32_0 : i32, i32
  }
  func.func @transform_16(%arg0: i32) -> (i32, i32, i32) {
    %c0_i32 = arith.constant 0 : i32
    %c0_i32_0 = arith.constant 0 : i32
    %c0_i32_1 = arith.constant 0 : i32
    return %arg0, %c0_i32, %c0_i32_0 : i32, i32, i32
  }
}

</mosaic_0001>

<llo_original>
// kernel: tpu_custom_call.1
$region0: #{tpu_custom_call.1}
  #allocation0 [shape = 'u32[]', space=smem, size = 0x4, offset = 0x4, fixed_abs, tag = 'smem constant byte address 0x4 - core index']
  #allocation1 [shape = 'u32[144,128]{1,0:T(1,128)}', space=vmem, size = 0x12000, scoped, tag = 'internal scratch']
  %s0 = inlined_call_operand.hbm [shape: f32[8,128], index: 0, kind: input, shape index: {}]
  %s1 = inlined_call_operand.hbm [shape: f32[8,128], index: 1, kind: output, shape index: {}]
  %s2 = sld [smem:[#allocation0]]
  $region41: #{tpu_custom_call.1} parent=0
    _
  %s4 = ssub.s32 1, %s2
  %s5 = scalar_select 0, %s4, %s2
  $region1: #{tpu_custom_call.1} parent=0
    #allocation2 [shape = 'u8[4096]{0}', space=vmem, size = 0x1000, scoped, tag = 'input window, operand 0, single buffered']
    #allocation3 [shape = 's32[2]{0}', space=sflag, size = 0x8, scoped, tag = 'scoped memory for tpu_custom_call.1']
    #allocation4 [shape = 's32[2]{0}', space=sflag, size = 0x8, scoped, tag = 'scoped memory for tpu_custom_call.1']
    #allocation5 [shape = 'u8[4096]{0}', space=vmem, size = 0x1000, scoped, tag = 'output window, operand 0, single buffered']
    %6 = vsyncpa [#allocation3], 0
    %7 = vsyncpa [#allocation4], 0
    loop: start=0, step=1, limit=4
    $region2: #{tpu_custom_call.1} parent=1 // loop_pre_header
      _
    $region3: #{tpu_custom_call.1} parent=1 // loop_header
      %s9 = sphi 0, %s13
      %p10 = scmp.ge.s32.totalorder %s9, 4
      %s17 = sphi 0, %s17
      %s19 = sphi 0, %s17
      %s20 = sphi 0, %s19
      %s34 = sphi 0, %s20
      %s38 = sphi 0, %s38
      %s40 = sphi 0, %s38
      %s41 = sphi 0, %s40
      %s55 = sphi 0, %s41
    $region4: #{tpu_custom_call.1} parent=1 // loop_header_branch
      %12 = sbr.rel (%p10) target = $region8
    $region5: #{tpu_custom_call.1} parent=1 // loop_body
      %s14 = ssub.s32 %s9, 1
      %s15 = ssub.s32 %s9, 2
      %s16 = sadd.s32 %s9, 1
      %s18 = sadd.s32 %s17, 1
      %p21 = scmp.eq.s32.totalorder %s9, 1
      %p22 = scmp.ne.s32.totalorder %s17, %s19
      %p23 = scmp.eq.s32.totalorder %s9, 0
      %p24 = por %p22, %p23
      %p25 = scmp.ne.s32.totalorder %s17, %s19
      %p26 = scmp.eq.s32.totalorder %s14, 1
      %p27 = por %p25, %p26
      %p28 = scmp.ne.s32.totalorder %s19, %s20
      %p29 = scmp.eq.s32.totalorder %s14, 0
      %p30 = por %p28, %p29
      %p31 = scmp.ne.s32.totalorder %s19, %s20
      %p32 = scmp.eq.s32.totalorder %s15, 1
      %p33 = por %p31, %p32
      %p35 = scmp.ne.s32.totalorder %s20, %s34
      %p36 = scmp.eq.s32.totalorder %s15, 0
      %p37 = por %p35, %p36
      %s39 = sadd.s32 %s38, 1
      %p42 = scmp.eq.s32.totalorder %s9, 1
      %p43 = scmp.ne.s32.totalorder %s38, %s40
      %p44 = scmp.eq.s32.totalorder %s9, 0
      %p45 = por %p43, %p44
      %p46 = scmp.ne.s32.totalorder %s38, %s40
      %p47 = scmp.eq.s32.totalorder %s14, 1
      %p48 = por %p46, %p47
      %p49 = scmp.ne.s32.totalorder %s40, %s41
      %p50 = scmp.eq.s32.totalorder %s14, 0
      %p51 = por %p49, %p50
      %p52 = scmp.ne.s32.totalorder %s40, %s41
      %p53 = scmp.eq.s32.totalorder %s15, 1
      %p54 = por %p52, %p53
      %p56 = scmp.ne.s32.totalorder %s41, %s55
      %p57 = scmp.eq.s32.totalorder %s15, 0
      %p58 = por %p56, %p57
      %p59 = scmp.le.s32.totalorder 1, %s9
      %p60 = scmp.lt.s32.totalorder %s9, 3
      %p61 = pnand %p59, %p60
      %p62 = pneg %p61
      // Predicated region
      $region9: #{tpu_custom_call.1} parent=5 // pred_check
        _
      $region10: #{tpu_custom_call.1} parent=5 // pred_check_branch
        %64 = sbr.rel (%p61) target = $region12
      $region11: #{tpu_custom_call.1} parent=5 // pred_region
        %s65 = ssub.s32 %s9, 1
        // Predicated region
        $region13: #{tpu_custom_call.1} parent=11 // pred_check
          %p66 = pneg %p30
        $region14: #{tpu_custom_call.1} parent=11 // pred_check_branch
          %68 = sbr.rel (%p66) target = $region16
        $region15: #{tpu_custom_call.1} parent=11 // pred_region
          %s70 = ssub.s32 128, 128
          %71 = vsyncadd [#allocation3], %s70
          %s73 = sshll.u32 [#allocation2], 4
          %s74 = int_to_ptr.vmem [resolvable:$true] %s73
          %76 = dma.hbm_to_vmem [thread:$0]  %s0, 128, %s74, [#allocation3]
        $region16: #{tpu_custom_call.1} parent=11 // pred_fallthru
          _
      $region12: #{tpu_custom_call.1} parent=5 // pred_fallthru
        _
      %p77 = scmp.lt.s32.totalorder %s9, 2
      // Predicated region
      $region17: #{tpu_custom_call.1} parent=5 // pred_check
        %p78 = pneg %p77
      $region18: #{tpu_custom_call.1} parent=5 // pred_check_branch
        %80 = sbr.rel (%p78) target = $region20
      $region19: #{tpu_custom_call.1} parent=5 // pred_region
        _
      $region20: #{tpu_custom_call.1} parent=5 // pred_fallthru
        _
      %p81 = scmp.le.s32.totalorder 1, %s9
      %p82 = scmp.lt.s32.totalorder %s9, 3
      %p83 = pnand %p81, %p82
      %p84 = pneg %p83
      // Predicated region
      $region21: #{tpu_custom_call.1} parent=5 // pred_check
        _
      $region22: #{tpu_custom_call.1} parent=5 // pred_check_branch
        %86 = sbr.rel (%p83) target = $region24
      $region23: #{tpu_custom_call.1} parent=5 // pred_region
        %s87 = ssub.s32 %s9, 1
        // Predicated region
        $region25: #{tpu_custom_call.1} parent=23 // pred_check
          %p88 = pneg %p30
        $region26: #{tpu_custom_call.1} parent=23 // pred_check_branch
          %90 = sbr.rel (%p88) target = $region28
        $region27: #{tpu_custom_call.1} parent=23 // pred_region
          %91 = dma.done [#allocation3], 128
        $region28: #{tpu_custom_call.1} parent=23 // pred_fallthru
          _
        %p92 = pneg %p30
        %p93 = pneg %p27
        %p94 = pneg %p51
        %p95 = pneg %p48
        %v96 = vld [vmem:[#allocation2] sm:$0xff]
        %v97 = vadd.f32 %v96, 1.0
        %98 = vst [vmem:[#allocation5] sm:$0xff] %v97
        // Predicated region
        $region29: #{tpu_custom_call.1} parent=23 // pred_check
          %p99 = pneg %p48
        $region30: #{tpu_custom_call.1} parent=23 // pred_check_branch
          %101 = sbr.rel (%p99) target = $region32
        $region31: #{tpu_custom_call.1} parent=23 // pred_region
          %s103 = ssub.s32 128, 128
          %104 = vsyncadd [#allocation4], %s103
          %s106 = sshll.u32 [#allocation5], 4
          %s107 = int_to_ptr.vmem [resolvable:$true] %s106
          %109 = dma.vmem_to_hbm [thread:$0]  %s107, 128, %s1, [#allocation4]
        $region32: #{tpu_custom_call.1} parent=23 // pred_fallthru
          _
        // Predicated region
        $region33: #{tpu_custom_call.1} parent=23 // pred_check
          %p110 = pneg %p48
        $region34: #{tpu_custom_call.1} parent=23 // pred_check_branch
          %112 = sbr.rel (%p110) target = $region36
        $region35: #{tpu_custom_call.1} parent=23 // pred_region
          %113 = dma.done [#allocation4], 128
        $region36: #{tpu_custom_call.1} parent=23 // pred_fallthru
          _
      $region24: #{tpu_custom_call.1} parent=5 // pred_fallthru
        _
      %p114 = scmp.le.s32.totalorder 2, %s9
      // Predicated region
      $region37: #{tpu_custom_call.1} parent=5 // pred_check
        %p115 = pneg %p114
      $region38: #{tpu_custom_call.1} parent=5 // pred_check_branch
        %117 = sbr.rel (%p115) target = $region40
      $region39: #{tpu_custom_call.1} parent=5 // pred_region
        %s118 = ssub.s32 %s9, 2
      $region40: #{tpu_custom_call.1} parent=5 // pred_fallthru
        _
    $region6: #{tpu_custom_call.1} parent=1 // loop_footer
      %s13 = sadd.s32 1, %s9
    $region7: #{tpu_custom_call.1} parent=1 // loop_footer_branch
      %8 = sbr.rel target = $region3
    $region8: #{tpu_custom_call.1} parent=1 // loop_exit
      _
    %119 = vsyncpa [#allocation3], 1
    %s120 = scalar_lea.sflag [#allocation3], 1
    %121 = vsyncpa %s120, 1
    %122 = vsyncpa [#allocation4], 1
    %s123 = scalar_lea.sflag [#allocation4], 1
    %124 = vsyncpa %s123, 1

// kernel: tpu_custom_call.1
$region0: #{tpu_custom_call.1}
  #allocation0 [shape = 'u32[]', space=smem, size = 0x4, offset = 0x4, fixed_abs, tag = 'smem constant byte address 0x4 - core index']
  #allocation1 [shape = 'u32[144,128]{1,0:T(1,128)}', space=vmem, size = 0x12000, scoped, tag = 'internal scratch']
  %s0 = inlined_call_operand.hbm [shape: f32[8,32], index: 0, kind: input, shape index: {}]
  %s1 = inlined_call_operand.hbm [shape: f32[8,32], index: 1, kind: input, shape index: {}]
  %s2 = inlined_call_operand.vmem [shape: f32[2,16,32], index: 2, kind: input, shape index: {}]
  %s3 = inlined_call_operand.vmem [shape: f32[2,1,32], index: 3, kind: input, shape index: {}]
  %s4 = inlined_call_operand.vmem [shape: f32[32,192], index: 4, kind: input, shape index: {}]
  %s5 = inlined_call_operand.vmem [shape: f32[1,192], index: 5, kind: input, shape index: {}]
  %s6 = inlined_call_operand.vmem [shape: f32[32,32], index: 6, kind: input, shape index: {}]
  %s7 = inlined_call_operand.vmem [shape: f32[1,32], index: 7, kind: input, shape index: {}]
  %s8 = inlined_call_operand.vmem [shape: f32[32,64], index: 8, kind: input, shape index: {}]
  %s9 = inlined_call_operand.vmem [shape: f32[1,64], index: 9, kind: input, shape index: {}]
  %s10 = inlined_call_operand.hbm [shape: f32[4,8,32], index: 10, kind: input, shape index: {}]
  %s11 = inlined_call_operand.vmem [shape: f32[1,32], index: 11, kind: input, shape index: {}]
  %s12 = inlined_call_operand.hbm [shape: f32[32,128], index: 12, kind: input, shape index: {}]
  %s13 = inlined_call_operand.vmem [shape: f32[1,128], index: 13, kind: input, shape index: {}]
  %s14 = inlined_call_operand.vmem [shape: f32[128,32], index: 14, kind: input, shape index: {}]
  %s15 = inlined_call_operand.vmem [shape: f32[1,32], index: 15, kind: input, shape index: {}]
  %s16 = inlined_call_operand.hbm [shape: f32[2,8,32], index: 16, kind: output, shape index: {}]
  %s17 = sld [smem:[#allocation0]]
  $region113: #{tpu_custom_call.1} parent=0
    _
  %s19 = ssub.s32 1, %s17
  %s20 = scalar_select 0, %s19, %s17
  $region1: #{tpu_custom_call.1} parent=0
    #allocation2 [shape = 'u8[4096]{0}', space=vmem, size = 0x1000, scoped, tag = 'input window, operand 0, single buffered']
    #allocation3 [shape = 's32[2]{0}', space=sflag, size = 0x8, scoped, tag = 'scoped memory for tpu_custom_call.1']
    #allocation4 [shape = 's32[2]{0}', space=sflag, size = 0x8, scoped, tag = 'scoped memory for tpu_custom_call.1']
    #allocation5 [shape = 'u8[4096]{0}', space=vmem, size = 0x1000, scoped, tag = 'input window, operand 1, single buffered']
    #allocation6 [shape = 's32[1]{0}', space=sflag, size = 0x4, scoped, tag = 'scoped memory for tpu_custom_call.1']
    #allocation7 [shape = 'u8[16384]{0}', space=vmem, size = 0x4000, scoped, tag = 'input window, operand 10, single buffered']
    #allocation8 [shape = 'u8[16384]{0}', space=vmem, size = 0x4000, scoped, tag = 'input window, operand 12, single buffered']
    #allocation9 [shape = 's32[1]{0}', space=sflag, size = 0x4, scoped, tag = 'scoped memory for tpu_custom_call.1']
    #allocation10 [shape = 'u8[8192]{0}', space=vmem, size = 0x2000, scoped, tag = 'output window, operand 0']
    %21 = vsyncpa [#allocation3], 0
    %22 = vsyncpa [#allocation6], 0
    %23 = vsyncpa [#allocation9], 0
    %24 = vsyncpa [#allocation4], 0
    %s25 = scalar_lea.sflag [#allocation4], 1
    %26 = vsyncpa %s25, 0
    loop: start=0, step=1, limit=4
    $region2: #{tpu_custom_call.1} parent=1 // loop_pre_header
      _
    $region3: #{tpu_custom_call.1} parent=1 // loop_header
      %s28 = sphi 0, %s32
      %p29 = scmp.ge.s32.totalorder %s28, 4
      %s36 = sphi 0, %s36
      %s38 = sphi 0, %s36
      %s39 = sphi 0, %s38
      %s53 = sphi 0, %s39
      %s57 = sphi 0, %s57
      %s59 = sphi 0, %s57
      %s60 = sphi 0, %s59
      %s74 = sphi 0, %s60
      %s80 = sphi 0, %s82
      %s83 = sphi 0, %s80
      %s84 = sphi 0, %s83
      %s100 = sphi 0, %s84
      %s106 = sphi 0, %s108
      %s109 = sphi 0, %s106
      %s110 = sphi 0, %s109
      %s126 = sphi 0, %s110
      %s130 = sphi 0, %s130
      %s132 = sphi 0, %s130
      %s133 = sphi 0, %s132
      %s147 = sphi 0, %s133
      %s151 = sphi 0, %s151
      %s153 = sphi 0, %s151
      %s154 = sphi 0, %s153
      %s168 = sphi 0, %s154
      %s172 = sphi 0, %s172
      %s174 = sphi 0, %s172
      %s175 = sphi 0, %s174
      %s189 = sphi 0, %s175
      %s193 = sphi 0, %s193
      %s195 = sphi 0, %s193
      %s196 = sphi 0, %s195
      %s210 = sphi 0, %s196
      %s214 = sphi 0, %s214
      %s216 = sphi 0, %s214
      %s217 = sphi 0, %s216
      %s231 = sphi 0, %s217
      %s235 = sphi 0, %s235
      %s237 = sphi 0, %s235
      %s238 = sphi 0, %s237
      %s252 = sphi 0, %s238
      %s256 = sphi 0, %s256
      %s258 = sphi 0, %s256
      %s259 = sphi 0, %s258
      %s273 = sphi 0, %s259
      %s277 = sphi 0, %s277
      %s279 = sphi 0, %s277
      %s280 = sphi 0, %s279
      %s294 = sphi 0, %s280
      %s298 = sphi 0, %s298
      %s300 = sphi 0, %s298
      %s301 = sphi 0, %s300
      %s315 = sphi 0, %s301
      %s319 = sphi 0, %s319
      %s321 = sphi 0, %s319
      %s322 = sphi 0, %s321
      %s336 = sphi 0, %s322
      %s340 = sphi 0, %s340
      %s342 = sphi 0, %s340
      %s343 = sphi 0, %s342
      %s357 = sphi 0, %s343
      %s361 = sphi 0, %s361
      %s363 = sphi 0, %s361
      %s364 = sphi 0, %s363
      %s378 = sphi 0, %s364
      %s384 = sphi 0, %s386
      %s387 = sphi 0, %s384
      %s388 = sphi 0, %s387
      %s404 = sphi 0, %s388
    $region4: #{tpu_custom_call.1} parent=1 // loop_header_branch
      %31 = sbr.rel (%p29) target = $region8
    $region5: #{tpu_custom_call.1} parent=1 // loop_body
      %s33 = ssub.s32 %s28, 1
      %s34 = ssub.s32 %s28, 2
      %s35 = sadd.s32 %s28, 1
      %s37 = sadd.s32 %s36, 1
      %p40 = scmp.eq.s32.totalorder %s28, 1
      %p41 = scmp.ne.s32.totalorder %s36, %s38
      %p42 = scmp.eq.s32.totalorder %s28, 0
      %p43 = por %p41, %p42
      %p44 = scmp.ne.s32.totalorder %s36, %s38
      %p45 = scmp.eq.s32.totalorder %s33, 1
      %p46 = por %p44, %p45
      %p47 = scmp.ne.s32.totalorder %s38, %s39
      %p48 = scmp.eq.s32.totalorder %s33, 0
      %p49 = por %p47, %p48
      %p50 = scmp.ne.s32.totalorder %s38, %s39
      %p51 = scmp.eq.s32.totalorder %s34, 1
      %p52 = por %p50, %p51
      %p54 = scmp.ne.s32.totalorder %s39, %s53
      %p55 = scmp.eq.s32.totalorder %s34, 0
      %p56 = por %p54, %p55
      %s58 = sadd.s32 %s57, 1
      %p61 = scmp.eq.s32.totalorder %s28, 1
      %p62 = scmp.ne.s32.totalorder %s57, %s59
      %p63 = scmp.eq.s32.totalorder %s28, 0
      %p64 = por %p62, %p63
      %p65 = scmp.ne.s32.totalorder %s57, %s59
      %p66 = scmp.eq.s32.totalorder %s33, 1
      %p67 = por %p65, %p66
      %p68 = scmp.ne.s32.totalorder %s59, %s60
      %p69 = scmp.eq.s32.totalorder %s33, 0
      %p70 = por %p68, %p69
      %p71 = scmp.ne.s32.totalorder %s59, %s60
      %p72 = scmp.eq.s32.totalorder %s34, 1
      %p73 = por %p71, %p72
      %p75 = scmp.ne.s32.totalorder %s60, %s74
      %p76 = scmp.eq.s32.totalorder %s34, 0
      %p77 = por %p75, %p76
      %s78 = ssub.s32 %s28, %s35
      %p79 = scmp.eq.s32.totalorder %s78, 0
      %s81 = sadd.s32 %s80, 1
      %s82 = scalar_select %p79, %s80, %s81
      %p85 = pneg %p79
      %p86 = scmp.eq.s32.totalorder %s28, 1
      %p87 = por %p85, %p86
      %p88 = scmp.ne.s32.totalorder %s80, %s83
      %p89 = scmp.eq.s32.totalorder %s28, 0
      %p90 = por %p88, %p89
      %p91 = scmp.ne.s32.totalorder %s80, %s83
      %p92 = scmp.eq.s32.totalorder %s33, 1
      %p93 = por %p91, %p92
      %p94 = scmp.ne.s32.totalorder %s83, %s84
      %p95 = scmp.eq.s32.totalorder %s33, 0
      %p96 = por %p94, %p95
      %p97 = scmp.ne.s32.totalorder %s83, %s84
      %p98 = scmp.eq.s32.totalorder %s34, 1
      %p99 = por %p97, %p98
      %p101 = scmp.ne.s32.totalorder %s84, %s100
      %p102 = scmp.eq.s32.totalorder %s34, 0
      %p103 = por %p101, %p102
      %s104 = ssub.s32 %s28, %s35
      %p105 = scmp.eq.s32.totalorder %s104, 0
      %s107 = sadd.s32 %s106, 1
      %s108 = scalar_select %p105, %s106, %s107
      %p111 = pneg %p105
      %p112 = scmp.eq.s32.totalorder %s28, 1
      %p113 = por %p111, %p112
      %p114 = scmp.ne.s32.totalorder %s106, %s109
      %p115 = scmp.eq.s32.totalorder %s28, 0
      %p116 = por %p114, %p115
      %p117 = scmp.ne.s32.totalorder %s106, %s109
      %p118 = scmp.eq.s32.totalorder %s33, 1
      %p119 = por %p117, %p118
      %p120 = scmp.ne.s32.totalorder %s109, %s110
      %p121 = scmp.eq.s32.totalorder %s33, 0
      %p122 = por %p120, %p121
      %p123 = scmp.ne.s32.totalorder %s109, %s110
      %p124 = scmp.eq.s32.totalorder %s34, 1
      %p125 = por %p123, %p124
      %p127 = scmp.ne.s32.totalorder %s110, %s126
      %p128 = scmp.eq.s32.totalorder %s34, 0
      %p129 = por %p127, %p128
      %s131 = sadd.s32 %s130, 1
      %p134 = scmp.eq.s32.totalorder %s28, 1
      %p135 = scmp.ne.s32.totalorder %s130, %s132
      %p136 = scmp.eq.s32.totalorder %s28, 0
      %p137 = por %p135, %p136
      %p138 = scmp.ne.s32.totalorder %s130, %s132
      %p139 = scmp.eq.s32.totalorder %s33, 1
      %p140 = por %p138, %p139
      %p141 = scmp.ne.s32.totalorder %s132, %s133
      %p142 = scmp.eq.s32.totalorder %s33, 0
      %p143 = por %p141, %p142
      %p144 = scmp.ne.s32.totalorder %s132, %s133
      %p145 = scmp.eq.s32.totalorder %s34, 1
      %p146 = por %p144, %p145
      %p148 = scmp.ne.s32.totalorder %s133, %s147
      %p149 = scmp.eq.s32.totalorder %s34, 0
      %p150 = por %p148, %p149
      %s152 = sadd.s32 %s151, 1
      %p155 = scmp.eq.s32.totalorder %s28, 1
      %p156 = scmp.ne.s32.totalorder %s151, %s153
      %p157 = scmp.eq.s32.totalorder %s28, 0
      %p158 = por %p156, %p157
      %p159 = scmp.ne.s32.totalorder %s151, %s153
      %p160 = scmp.eq.s32.totalorder %s33, 1
      %p161 = por %p159, %p160
      %p162 = scmp.ne.s32.totalorder %s153, %s154
      %p163 = scmp.eq.s32.totalorder %s33, 0
      %p164 = por %p162, %p163
      %p165 = scmp.ne.s32.totalorder %s153, %s154
      %p166 = scmp.eq.s32.totalorder %s34, 1
      %p167 = por %p165, %p166
      %p169 = scmp.ne.s32.totalorder %s154, %s168
      %p170 = scmp.eq.s32.totalorder %s34, 0
      %p171 = por %p169, %p170
      %s173 = sadd.s32 %s172, 1
      %p176 = scmp.eq.s32.totalorder %s28, 1
      %p177 = scmp.ne.s32.totalorder %s172, %s174
      %p178 = scmp.eq.s32.totalorder %s28, 0
      %p179 = por %p177, %p178
      %p180 = scmp.ne.s32.totalorder %s172, %s174
      %p181 = scmp.eq.s32.totalorder %s33, 1
      %p182 = por %p180, %p181
      %p183 = scmp.ne.s32.totalorder %s174, %s175
      %p184 = scmp.eq.s32.totalorder %s33, 0
      %p185 = por %p183, %p184
      %p186 = scmp.ne.s32.totalorder %s174, %s175
      %p187 = scmp.eq.s32.totalorder %s34, 1
      %p188 = por %p186, %p187
      %p190 = scmp.ne.s32.totalorder %s175, %s189
      %p191 = scmp.eq.s32.totalorder %s34, 0
      %p192 = por %p190, %p191
      %s194 = sadd.s32 %s193, 1
      %p197 = scmp.eq.s32.totalorder %s28, 1
      %p198 = scmp.ne.s32.totalorder %s193, %s195
      %p199 = scmp.eq.s32.totalorder %s28, 0
      %p200 = por %p198, %p199
      %p201 = scmp.ne.s32.totalorder %s193, %s195
      %p202 = scmp.eq.s32.totalorder %s33, 1
      %p203 = por %p201, %p202
      %p204 = scmp.ne.s32.totalorder %s195, %s196
      %p205 = scmp.eq.s32.totalorder %s33, 0
      %p206 = por %p204, %p205
      %p207 = scmp.ne.s32.totalorder %s195, %s196
      %p208 = scmp.eq.s32.totalorder %s34, 1
      %p209 = por %p207, %p208
      %p211 = scmp.ne.s32.totalorder %s196, %s210
      %p212 = scmp.eq.s32.totalorder %s34, 0
      %p213 = por %p211, %p212
      %s215 = sadd.s32 %s214, 1
      %p218 = scmp.eq.s32.totalorder %s28, 1
      %p219 = scmp.ne.s32.totalorder %s214, %s216
      %p220 = scmp.eq.s32.totalorder %s28, 0
      %p221 = por %p219, %p220
      %p222 = scmp.ne.s32.totalorder %s214, %s216
      %p223 = scmp.eq.s32.totalorder %s33, 1
      %p224 = por %p222, %p223
      %p225 = scmp.ne.s32.totalorder %s216, %s217
      %p226 = scmp.eq.s32.totalorder %s33, 0
      %p227 = por %p225, %p226
      %p228 = scmp.ne.s32.totalorder %s216, %s217
      %p229 = scmp.eq.s32.totalorder %s34, 1
      %p230 = por %p228, %p229
      %p232 = scmp.ne.s32.totalorder %s217, %s231
      %p233 = scmp.eq.s32.totalorder %s34, 0
      %p234 = por %p232, %p233
      %s236 = sadd.s32 %s235, 1
      %p239 = scmp.eq.s32.totalorder %s28, 1
      %p240 = scmp.ne.s32.totalorder %s235, %s237
      %p241 = scmp.eq.s32.totalorder %s28, 0
      %p242 = por %p240, %p241
      %p243 = scmp.ne.s32.totalorder %s235, %s237
      %p244 = scmp.eq.s32.totalorder %s33, 1
      %p245 = por %p243, %p244
      %p246 = scmp.ne.s32.totalorder %s237, %s238
      %p247 = scmp.eq.s32.totalorder %s33, 0
      %p248 = por %p246, %p247
      %p249 = scmp.ne.s32.totalorder %s237, %s238
      %p250 = scmp.eq.s32.totalorder %s34, 1
      %p251 = por %p249, %p250
      %p253 = scmp.ne.s32.totalorder %s238, %s252
      %p254 = scmp.eq.s32.totalorder %s34, 0
      %p255 = por %p253, %p254
      %s257 = sadd.s32 %s256, 1
      %p260 = scmp.eq.s32.totalorder %s28, 1
      %p261 = scmp.ne.s32.totalorder %s256, %s258
      %p262 = scmp.eq.s32.totalorder %s28, 0
      %p263 = por %p261, %p262
      %p264 = scmp.ne.s32.totalorder %s256, %s258
      %p265 = scmp.eq.s32.totalorder %s33, 1
      %p266 = por %p264, %p265
      %p267 = scmp.ne.s32.totalorder %s258, %s259
      %p268 = scmp.eq.s32.totalorder %s33, 0
      %p269 = por %p267, %p268
      %p270 = scmp.ne.s32.totalorder %s258, %s259
      %p271 = scmp.eq.s32.totalorder %s34, 1
      %p272 = por %p270, %p271
      %p274 = scmp.ne.s32.totalorder %s259, %s273
      %p275 = scmp.eq.s32.totalorder %s34, 0
      %p276 = por %p274, %p275
      %s278 = sadd.s32 %s277, 1
      %p281 = scmp.eq.s32.totalorder %s28, 1
      %p282 = scmp.ne.s32.totalorder %s277, %s279
      %p283 = scmp.eq.s32.totalorder %s28, 0
      %p284 = por %p282, %p283
      %p285 = scmp.ne.s32.totalorder %s277, %s279
      %p286 = scmp.eq.s32.totalorder %s33, 1
      %p287 = por %p285, %p286
      %p288 = scmp.ne.s32.totalorder %s279, %s280
      %p289 = scmp.eq.s32.totalorder %s33, 0
      %p290 = por %p288, %p289
      %p291 = scmp.ne.s32.totalorder %s279, %s280
      %p292 = scmp.eq.s32.totalorder %s34, 1
      %p293 = por %p291, %p292
      %p295 = scmp.ne.s32.totalorder %s280, %s294
      %p296 = scmp.eq.s32.totalorder %s34, 0
      %p297 = por %p295, %p296
      %s299 = sadd.s32 %s298, 1
      %p302 = scmp.eq.s32.totalorder %s28, 1
      %p303 = scmp.ne.s32.totalorder %s298, %s300
      %p304 = scmp.eq.s32.totalorder %s28, 0
      %p305 = por %p303, %p304
      %p306 = scmp.ne.s32.totalorder %s298, %s300
      %p307 = scmp.eq.s32.totalorder %s33, 1
      %p308 = por %p306, %p307
      %p309 = scmp.ne.s32.totalorder %s300, %s301
      %p310 = scmp.eq.s32.totalorder %s33, 0
      %p311 = por %p309, %p310
      %p312 = scmp.ne.s32.totalorder %s300, %s301
      %p313 = scmp.eq.s32.totalorder %s34, 1
      %p314 = por %p312, %p313
      %p316 = scmp.ne.s32.totalorder %s301, %s315
      %p317 = scmp.eq.s32.totalorder %s34, 0
      %p318 = por %p316, %p317
      %s320 = sadd.s32 %s319, 1
      %p323 = scmp.eq.s32.totalorder %s28, 1
      %p324 = scmp.ne.s32.totalorder %s319, %s321
      %p325 = scmp.eq.s32.totalorder %s28, 0
      %p326 = por %p324, %p325
      %p327 = scmp.ne.s32.totalorder %s319, %s321
      %p328 = scmp.eq.s32.totalorder %s33, 1
      %p329 = por %p327, %p328
      %p330 = scmp.ne.s32.totalorder %s321, %s322
      %p331 = scmp.eq.s32.totalorder %s33, 0
      %p332 = por %p330, %p331
      %p333 = scmp.ne.s32.totalorder %s321, %s322
      %p334 = scmp.eq.s32.totalorder %s34, 1
      %p335 = por %p333, %p334
      %p337 = scmp.ne.s32.totalorder %s322, %s336
      %p338 = scmp.eq.s32.totalorder %s34, 0
      %p339 = por %p337, %p338
      %s341 = sadd.s32 %s340, 1
      %p344 = scmp.eq.s32.totalorder %s28, 1
      %p345 = scmp.ne.s32.totalorder %s340, %s342
      %p346 = scmp.eq.s32.totalorder %s28, 0
      %p347 = por %p345, %p346
      %p348 = scmp.ne.s32.totalorder %s340, %s342
      %p349 = scmp.eq.s32.totalorder %s33, 1
      %p350 = por %p348, %p349
      %p351 = scmp.ne.s32.totalorder %s342, %s343
      %p352 = scmp.eq.s32.totalorder %s33, 0
      %p353 = por %p351, %p352
      %p354 = scmp.ne.s32.totalorder %s342, %s343
      %p355 = scmp.eq.s32.totalorder %s34, 1
      %p356 = por %p354, %p355
      %p358 = scmp.ne.s32.totalorder %s343, %s357
      %p359 = scmp.eq.s32.totalorder %s34, 0
      %p360 = por %p358, %p359
      %s362 = sadd.s32 %s361, 1
      %p365 = scmp.eq.s32.totalorder %s28, 1
      %p366 = scmp.ne.s32.totalorder %s361, %s363
      %p367 = scmp.eq.s32.totalorder %s28, 0
      %p368 = por %p366, %p367
      %p369 = scmp.ne.s32.totalorder %s361, %s363
      %p370 = scmp.eq.s32.totalorder %s33, 1
      %p371 = por %p369, %p370
      %p372 = scmp.ne.s32.totalorder %s363, %s364
      %p373 = scmp.eq.s32.totalorder %s33, 0
      %p374 = por %p372, %p373
      %p375 = scmp.ne.s32.totalorder %s363, %s364
      %p376 = scmp.eq.s32.totalorder %s34, 1
      %p377 = por %p375, %p376
      %p379 = scmp.ne.s32.totalorder %s364, %s378
      %p380 = scmp.eq.s32.totalorder %s34, 0
      %p381 = por %p379, %p380
      %s382 = ssub.s32 %s28, %s35
      %p383 = scmp.eq.s32.totalorder %s382, 0
      %s385 = sadd.s32 %s384, 1
      %s386 = scalar_select %p383, %s384, %s385
      %p389 = pneg %p383
      %p390 = scmp.eq.s32.totalorder %s28, 1
      %p391 = por %p389, %p390
      %p392 = scmp.ne.s32.totalorder %s384, %s387
      %p393 = scmp.eq.s32.totalorder %s28, 0
      %p394 = por %p392, %p393
      %p395 = scmp.ne.s32.totalorder %s384, %s387
      %p396 = scmp.eq.s32.totalorder %s33, 1
      %p397 = por %p395, %p396
      %p398 = scmp.ne.s32.totalorder %s387, %s388
      %p399 = scmp.eq.s32.totalorder %s33, 0
      %p400 = por %p398, %p399
      %p401 = scmp.ne.s32.totalorder %s387, %s388
      %p402 = scmp.eq.s32.totalorder %s34, 1
      %p403 = por %p401, %p402
      %p405 = scmp.ne.s32.totalorder %s388, %s404
      %p406 = scmp.eq.s32.totalorder %s34, 0
      %p407 = por %p405, %p406
      %p408 = scmp.le.s32.totalorder 1, %s28
      %p409 = scmp.lt.s32.totalorder %s28, 3
      %p410 = pnand %p408, %p409
      %p411 = pneg %p410
      // Predicated region
      $region9: #{tpu_custom_call.1} parent=5 // pred_check
        _
      $region10: #{tpu_custom_call.1} parent=5 // pred_check_branch
        %413 = sbr.rel (%p410) target = $region12
      $region11: #{tpu_custom_call.1} parent=5 // pred_region
        %s414 = ssub.s32 %s28, 1
        // Predicated region
        $region13: #{tpu_custom_call.1} parent=11 // pred_check
          %p415 = pneg %p49
        $region14: #{tpu_custom_call.1} parent=11 // pred_check_branch
          %417 = sbr.rel (%p415) target = $region16
        $region15: #{tpu_custom_call.1} parent=11 // pred_region
          %s419 = ssub.s32 128, 128
          %420 = vsyncadd [#allocation3], %s419
          %s422 = sshll.u32 [#allocation2], 4
          %s423 = int_to_ptr.vmem [resolvable:$true] %s422
          %425 = dma.hbm_to_vmem [thread:$0]  %s0, 128, %s423, [#allocation3]
        $region16: #{tpu_custom_call.1} parent=11 // pred_fallthru
          _
        // Predicated region
        $region17: #{tpu_custom_call.1} parent=11 // pred_check
          %p426 = pneg %p70
        $region18: #{tpu_custom_call.1} parent=11 // pred_check_branch
          %428 = sbr.rel (%p426) target = $region20
        $region19: #{tpu_custom_call.1} parent=11 // pred_region
          %s430 = ssub.s32 128, 128
          %431 = vsyncadd [#allocation6], %s430
          %s433 = sshll.u32 [#allocation5], 4
          %s434 = int_to_ptr.vmem [resolvable:$true] %s433
          %436 = dma.hbm_to_vmem [thread:$0]  %s1, 128, %s434, [#allocation6]
        $region20: #{tpu_custom_call.1} parent=11 // pred_fallthru
          _
        // Predicated region
        $region21: #{tpu_custom_call.1} parent=11 // pred_check
          %p437 = pneg %p143
        $region22: #{tpu_custom_call.1} parent=11 // pred_check_branch
          %439 = sbr.rel (%p437) target = $region24
        $region23: #{tpu_custom_call.1} parent=11 // pred_region
          _
        $region24: #{tpu_custom_call.1} parent=11 // pred_fallthru
          _
        // Predicated region
        $region25: #{tpu_custom_call.1} parent=11 // pred_check
          %p440 = pneg %p164
        $region26: #{tpu_custom_call.1} parent=11 // pred_check_branch
          %442 = sbr.rel (%p440) target = $region28
        $region27: #{tpu_custom_call.1} parent=11 // pred_region
          _
        $region28: #{tpu_custom_call.1} parent=11 // pred_fallthru
          _
        // Predicated region
        $region29: #{tpu_custom_call.1} parent=11 // pred_check
          %p443 = pneg %p185
        $region30: #{tpu_custom_call.1} parent=11 // pred_check_branch
          %445 = sbr.rel (%p443) target = $region32
        $region31: #{tpu_custom_call.1} parent=11 // pred_region
          _
        $region32: #{tpu_custom_call.1} parent=11 // pred_fallthru
          _
        // Predicated region
        $region33: #{tpu_custom_call.1} parent=11 // pred_check
          %p446 = pneg %p206
        $region34: #{tpu_custom_call.1} parent=11 // pred_check_branch
          %448 = sbr.rel (%p446) target = $region36
        $region35: #{tpu_custom_call.1} parent=11 // pred_region
          _
        $region36: #{tpu_custom_call.1} parent=11 // pred_fallthru
          _
        // Predicated region
        $region37: #{tpu_custom_call.1} parent=11 // pred_check
          %p449 = pneg %p227
        $region38: #{tpu_custom_call.1} parent=11 // pred_check_branch
          %451 = sbr.rel (%p449) target = $region40
        $region39: #{tpu_custom_call.1} parent=11 // pred_region
          _
        $region40: #{tpu_custom_call.1} parent=11 // pred_fallthru
          _
        // Predicated region
        $region41: #{tpu_custom_call.1} parent=11 // pred_check
          %p452 = pneg %p248
        $region42: #{tpu_custom_call.1} parent=11 // pred_check_branch
          %454 = sbr.rel (%p452) target = $region44
        $region43: #{tpu_custom_call.1} parent=11 // pred_region
          _
        $region44: #{tpu_custom_call.1} parent=11 // pred_fallthru
          _
        // Predicated region
        $region45: #{tpu_custom_call.1} parent=11 // pred_check
          %p455 = pneg %p269
        $region46: #{tpu_custom_call.1} parent=11 // pred_check_branch
          %457 = sbr.rel (%p455) target = $region48
        $region47: #{tpu_custom_call.1} parent=11 // pred_region
          %s459 = ssub.s32 512, 512
          %460 = vsyncadd [#allocation6], %s459
          %s461 = sshll.u32 [#allocation7], 4
          %s462 = int_to_ptr.vmem [resolvable:$true] %s461
          %467 = dma.hbm_to_vmem [thread:$0]  %s10, 512, %s462, [#allocation6], 128, 128, 8
        $region48: #{tpu_custom_call.1} parent=11 // pred_fallthru
          _
        // Predicated region
        $region49: #{tpu_custom_call.1} parent=11 // pred_check
          %p468 = pneg %p290
        $region50: #{tpu_custom_call.1} parent=11 // pred_check_branch
          %470 = sbr.rel (%p468) target = $region52
        $region51: #{tpu_custom_call.1} parent=11 // pred_region
          _
        $region52: #{tpu_custom_call.1} parent=11 // pred_fallthru
          _
        // Predicated region
        $region53: #{tpu_custom_call.1} parent=11 // pred_check
          %p471 = pneg %p311
        $region54: #{tpu_custom_call.1} parent=11 // pred_check_branch
          %473 = sbr.rel (%p471) target = $region56
        $region55: #{tpu_custom_call.1} parent=11 // pred_region
          %s475 = ssub.s32 512, 512
          %476 = vsyncadd [#allocation9], %s475
          %s477 = sshll.u32 [#allocation8], 4
          %s478 = int_to_ptr.vmem [resolvable:$true] %s477
          %483 = dma.hbm_to_vmem [thread:$0]  %s12, 512, %s478, [#allocation9], 128, 128, 8
        $region56: #{tpu_custom_call.1} parent=11 // pred_fallthru
          _
        // Predicated region
        $region57: #{tpu_custom_call.1} parent=11 // pred_check
          %p484 = pneg %p332
        $region58: #{tpu_custom_call.1} parent=11 // pred_check_branch
          %486 = sbr.rel (%p484) target = $region60
        $region59: #{tpu_custom_call.1} parent=11 // pred_region
          _
        $region60: #{tpu_custom_call.1} parent=11 // pred_fallthru
          _
        // Predicated region
        $region61: #{tpu_custom_call.1} parent=11 // pred_check
          %p487 = pneg %p353
        $region62: #{tpu_custom_call.1} parent=11 // pred_check_branch
          %489 = sbr.rel (%p487) target = $region64
        $region63: #{tpu_custom_call.1} parent=11 // pred_region
          _
        $region64: #{tpu_custom_call.1} parent=11 // pred_fallthru
          _
        // Predicated region
        $region65: #{tpu_custom_call.1} parent=11 // pred_check
          %p490 = pneg %p374
        $region66: #{tpu_custom_call.1} parent=11 // pred_check_branch
          %492 = sbr.rel (%p490) target = $region68
        $region67: #{tpu_custom_call.1} parent=11 // pred_region
          _
        $region68: #{tpu_custom_call.1} parent=11 // pred_fallthru
          _
      $region12: #{tpu_custom_call.1} parent=5 // pred_fallthru
        _
      %p493 = scmp.lt.s32.totalorder %s28, 2
      // Predicated region
      $region69: #{tpu_custom_call.1} parent=5 // pred_check
        %p494 = pneg %p493
      $region70: #{tpu_custom_call.1} parent=5 // pred_check_branch
        %496 = sbr.rel (%p494) target = $region72
      $region71: #{tpu_custom_call.1} parent=5 // pred_region
        // Predicated region
        $region73: #{tpu_custom_call.1} parent=71 // pred_check
          %p497 = pneg %p90
        $region74: #{tpu_custom_call.1} parent=71 // pred_check_branch
          %499 = sbr.rel (%p497) target = $region76
        $region75: #{tpu_custom_call.1} parent=71 // pred_region
          %p500 = scmp.lt.s32.totalorder %s28, 1
          %s501 = scalar_select %p500, %s28, 1
          %s502 = smul.addr %s501, 2
          %s503 = smul.addr %s502, 8
          %s504 = scalar_lea.vmem %s2, %s503
        $region76: #{tpu_custom_call.1} parent=71 // pred_fallthru
          _
        // Predicated region
        $region77: #{tpu_custom_call.1} parent=71 // pred_check
          %p505 = pneg %p116
        $region78: #{tpu_custom_call.1} parent=71 // pred_check_branch
          %507 = sbr.rel (%p505) target = $region80
        $region79: #{tpu_custom_call.1} parent=71 // pred_region
          %p508 = scmp.lt.s32.totalorder %s28, 1
          %s509 = scalar_select %p508, %s28, 1
          %s510 = scalar_lea.vmem %s3, %s509
        $region80: #{tpu_custom_call.1} parent=71 // pred_fallthru
          _
      $region72: #{tpu_custom_call.1} parent=5 // pred_fallthru
        _
      %p511 = scmp.le.s32.totalorder 1, %s28
      %p512 = scmp.lt.s32.totalorder %s28, 3
      %p513 = pnand %p511, %p512
      %p514 = pneg %p513
      // Predicated region
      $region81: #{tpu_custom_call.1} parent=5 // pred_check
        _
      $region82: #{tpu_custom_call.1} parent=5 // pred_check_branch
        %516 = sbr.rel (%p513) target = $region84
      $region83: #{tpu_custom_call.1} parent=5 // pred_region
        %s517 = ssub.s32 %s28, 1
        // Predicated region
        $region85: #{tpu_custom_call.1} parent=83 // pred_check
          %p518 = pneg %p49
        $region86: #{tpu_custom_call.1} parent=83 // pred_check_branch
          %520 = sbr.rel (%p518) target = $region88
        $region87: #{tpu_custom_call.1} parent=83 // pred_region
          %521 = dma.done [#allocation3], 128
        $region88: #{tpu_custom_call.1} parent=83 // pred_fallthru
          _
        // Predicated region
        $region89: #{tpu_custom_call.1} parent=83 // pred_check
          %p522 = pneg %p70
        $region90: #{tpu_custom_call.1} parent=83 // pred_check_branch
          %524 = sbr.rel (%p522) target = $region92
        $region91: #{tpu_custom_call.1} parent=83 // pred_region
          %525 = dma.done [#allocation6], 128
        $region92: #{tpu_custom_call.1} parent=83 // pred_fallthru
          _
        // Predicated region
        $region93: #{tpu_custom_call.1} parent=83 // pred_check
          %p526 = pneg %p269
        $region94: #{tpu_custom_call.1} parent=83 // pred_check_branch
          %528 = sbr.rel (%p526) target = $region96
        $region95: #{tpu_custom_call.1} parent=83 // pred_region
          %529 = dma.done [#allocation6], 512
        $region96: #{tpu_custom_call.1} parent=83 // pred_fallthru
          _
        // Predicated region
        $region97: #{tpu_custom_call.1} parent=83 // pred_check
          %p530 = pneg %p311
        $region98: #{tpu_custom_call.1} parent=83 // pred_check_branch
          %532 = sbr.rel (%p530) target = $region100
        $region99: #{tpu_custom_call.1} parent=83 // pred_region
          %533 = dma.done [#allocation9], 512
        $region100: #{tpu_custom_call.1} parent=83 // pred_fallthru
          _
        %p534 = pneg %p49
        %p535 = pneg %p46
        %p536 = pneg %p70
        %p537 = pneg %p67
        %p538 = scmp.lt.s32.totalorder %s33, 1
        %s539 = scalar_select %p538, %s33, 1
        %s540 = smul.addr %s539, 2
        %s541 = smul.addr %s540, 8
        %s542 = scalar_lea.vmem %s2, %s541
        %p543 = pneg %p96
        %p544 = pneg %p93
        %p545 = scmp.lt.s32.totalorder %s33, 1
        %s546 = scalar_select %p545, %s33, 1
        %s547 = scalar_lea.vmem %s3, %s546
        %p548 = pneg %p122
        %p549 = pneg %p119
        %p550 = pneg %p143
        %p551 = pneg %p140
        %p552 = pneg %p164
        %p553 = pneg %p161
        %p554 = pneg %p185
        %p555 = pneg %p182
        %p556 = pneg %p206
        %p557 = pneg %p203
        %p558 = pneg %p227
        %p559 = pneg %p224
        %p560 = pneg %p248
        %p561 = pneg %p245
        %p562 = pneg %p269
        %p563 = pneg %p266
        %p564 = pneg %p290
        %p565 = pneg %p287
        %p566 = pneg %p311
        %p567 = pneg %p308
        %p568 = pneg %p332
        %p569 = pneg %p329
        %p570 = pneg %p353
        %p571 = pneg %p350
        %p572 = pneg %p374
        %p573 = pneg %p371
        %p574 = pneg %p400
        %p575 = pneg %p397
        %s576 = sand.u32 %s387, 1
        %s577 = scalar_lea.sflag [#allocation4], %s576
        %s578 = sand.u32 %s387, 1
        %s579 = smul.addr %s578, 8
        %s580 = scalar_lea.vmem [#allocation10], %s579
        %p581 = scmp.lt.s32.totalorder %s33, 1
        %s582 = scalar_select %p581, %s33, 1
        %s583 = smul.addr %s582, 2
        %s584 = smul.addr %s583, 8
        %s585 = scalar_lea.vmem %s2, %s584
        %p586 = scmp.lt.s32.totalorder %s33, 1
        %s587 = scalar_select %p586, %s33, 1
        %s588 = scalar_lea.vmem %s3, %s587
        %v589 = vld [vmem:[#allocation2] sm:$0xff]
        %v590 = vld [vmem:[#allocation5] sm:$0xff]
        %v591 = vld [vmem:[%s588] sm:$0x1]
        %v592 = vxor.u32 %v591, 2147483648
        %v593 = vmul.f32 %v592, 1.442695
        %v594 = vpow.pop %v593
        %v595 = vadd.f32 %v594, 1.0
        %v596 = vrcp.pop %v595
        %v597 = vmul.f32 1.0, %v596
        %v598 = vmul.f32 %v591, %v597
        %v599 = vld [vmem:[%s4] sm:$0xff]
        %v600 = vld [vmem:[%s4 + $0x8] sm:$0xff]
        %v601 = vld [vmem:[%s4 + $0x10] sm:$0xff]
        %v602 = vld [vmem:[%s4 + $0x18] sm:$0xff]
        %v603 = vld [vmem:[%s4 + $0x20] sm:$0xff]
        %v604 = vld [vmem:[%s4 + $0x28] sm:$0xff]
        %v605 = vld [vmem:[%s4 + $0x30] sm:$0xff]
        %v606 = vld [vmem:[%s4 + $0x38] sm:$0xff]
        %v607 = vld [vmem:[%s5] sm:$0x3]
        %v609 = vlaneseq
        %v610 = vshrl.u32 %v609, 7
        %v611 = vsub.s32 0, %v610
        %v612 = vrot.slane %v607, %v611
        %v613 = vlaneseq
        %v614 = vshrl.u32 %v613, 7
        %v615 = vsub.s32 1, %v614
        %v616 = vrot.slane %v607, %v615
        %vm619 = vcmask 261120
        %v621 = vsel %vm619, %v598, 0
        %623 = vmatprep.subr.mxu0 0.0
        %624 = vmatpush1.msra.mxu0 0.0
        %625 = vmatprep.subr.mxu0 0.0
        %626 = vmatpush1.msra.mxu0 0.0
        %627 = vmatprep.subr.mxu0 0.0
        %628 = vmatpush1.msra.mxu0 0.0
        %629 = vmatprep.subr.mxu0 0.0
        %630 = vmatpush1.msra.mxu0 0.0
        %631 = vmatprep.subr.mxu0 0.0
        %632 = vmatpush1.msra.mxu0 0.0
        %633 = vmatprep.subr.mxu0 0.0
        %634 = vmatpush1.msra.mxu0 0.0
        %635 = vmatprep.subr.mxu0 0.0
        %636 = vmatpush1.msra.mxu0 0.0
        %637 = vmatprep.subr.mxu0 0.0
        %638 = vmatpush1.msra.mxu0 0.0
        %639 = vmatprep.subr.mxu0 0.0
        %640 = vmatpush1.msra.mxu0 0.0
        %641 = vmatprep.subr.mxu0 0.0
        %642 = vmatpush1.msra.mxu0 0.0
        %643 = vmatprep.subr.mxu0 0.0
        %644 = vmatpush1.msra.mxu0 0.0
        %645 = vmatprep.subr.mxu0 0.0
        %646 = vmatpush1.msra.mxu0 0.0
        %647 = vmatprep.subr.mxu0 %v606
        %648 = vmatpush1.msra.mxu0 %v605
        %649 = vmatprep.subr.mxu0 %v604
        %650 = vmatpush1.msra.mxu0 %v603
        %651 = vmatprep.subr.mxu0 %v602
        %652 = vmatpush1.msra.mxu0 %v601
        %653 = vmatprep.subr.mxu0 %v600
        %654 = vmatpush1.msra.mxu0 %v599
        %655 = vmatprep.subr.mxu0 0.0
        %656 = vmatpush2.msra.mxu0 0.0
        %657 = vmatprep.subr.mxu0 0.0
        %658 = vmatpush2.msra.mxu0 0.0
        %659 = vmatprep.subr.mxu0 0.0
        %660 = vmatpush2.msra.mxu0 0.0
        %661 = vmatprep.subr.mxu0 0.0
        %662 = vmatpush2.msra.mxu0 0.0
        %663 = vmatprep.subr.mxu0 0.0
        %664 = vmatpush2.msra.mxu0 0.0
        %665 = vmatprep.subr.mxu0 0.0
        %666 = vmatpush2.msra.mxu0 0.0
        %667 = vmatprep.subr.mxu0 0.0
        %668 = vmatpush2.msra.mxu0 0.0
        %669 = vmatprep.subr.mxu0 0.0
        %670 = vmatpush2.msra.mxu0 0.0
        %671 = vmatprep.subr.mxu0 0.0
        %672 = vmatpush2.msra.mxu0 0.0
        %673 = vmatprep.subr.mxu0 0.0
        %674 = vmatpush2.msra.mxu0 0.0
        %675 = vmatprep.subr.mxu0 0.0
        %676 = vmatpush2.msra.mxu0 0.0
        %677 = vmatprep.subr.mxu0 0.0
        %678 = vmatpush2.msra.mxu0 0.0
        %679 = vmatprep.subr.mxu0 0.0
        %680 = vmatpush2.msra.mxu0 0.0
        %681 = vmatprep.subr.mxu0 0.0
        %682 = vmatpush2.msra.mxu0 0.0
        %683 = vmatprep.subr.mxu0 0.0
        %684 = vmatpush2.msra.mxu0 0.0
        %685 = vmatprep.subr.mxu0 0.0
        %686 = vmatpush2.msra.mxu0 0.0
        %687 = vmatprep.mubr.f32.mxu0 0.0
        %688 = vmatmul.mubr.f32.gmra.mxu0 %v621
        %v689 = vpop.f32.mrf.mxu0
        %v690 = vadd.f32 %v612, %v689
        %v691 = vpop.f32.mrf.mxu0
        %v692 = vadd.f32 %v616, %v691
        %693 = vdwg.mxu0
        %v694 = vadd.f32 %v690, 1.0
        %v695 = vlaneseq
        %v696 = vshrl.u32 %v695, 7
        %v697 = vsub.s32 0, %v696
        %v698 = vrot.slane %v694, %v697
        %v699 = vmul.f32 %v590, %v698
        %v700 = vlaneseq
        %v701 = vshrl.u32 %v700, 7
        %v702 = vsub.s32 0, %v701
        %v703 = vrot.slane %v690, %v702
        %705 = vrot.lane.b32.xlu0 %v703, 96
        %v706 = vpop.permute.xlu0 %705
        %v708 = vadd.f32 %v699, %v706
        %v709 = vld [vmem:[%s585] sm:$0xff]
        %v710 = vld [vmem:[%s585 + $0x8] sm:$0xff]
        %v711 = vsel %vm619, %v709, 0.0
        %712 = vadd.xlane.f32.xlu0 %v711
        %v713 = vpop.xlane.xlu0 %712
        %v714 = vsel %vm619, %v710, 0.0
        %715 = vadd.xlane.f32.xlu0 %v714
        %v716 = vpop.xlane.xlu0 %715
        %v717 = vrcp.pop 32.0
        %v718 = vmul.f32 %v713, %v717
        %v719 = vmul.f32 %v716, %v717
        %v720 = vsub.f32 %v709, %v718
        %v721 = vsub.f32 %v710, %v719
        %v722 = vmul.f32 %v720, %v720
        %v723 = vmul.f32 %v721, %v721
        %v724 = vsel %vm619, %v722, 0.0
        %725 = vadd.xlane.f32.xlu0 %v724
        %v726 = vpop.xlane.xlu0 %725
        %v727 = vsel %vm619, %v723, 0.0
        %728 = vadd.xlane.f32.xlu0 %v727
        %v729 = vpop.xlane.xlu0 %728
        %v730 = vmul.f32 %v726, %v717
        %v731 = vmul.f32 %v729, %v717
        %v732 = vadd.f32 %v730, 1e-06
        %v733 = vadd.f32 %v731, 1e-06
        %v734 = vrsqrt.pop %v732
        %v735 = vrsqrt.pop %v733
        %v736 = vmul.f32 %v720, %v734
        %v737 = vmul.f32 %v721, %v735
        %v738 = vld [vmem:[%s6] sm:$0xff]
        %v739 = vld [vmem:[%s6 + $0x8] sm:$0xff]
        %v740 = vld [vmem:[%s6 + $0x10] sm:$0xff]
        %v741 = vld [vmem:[%s6 + $0x18] sm:$0xff]
        %v742 = vld [vmem:[%s7] sm:$0x1]
        %v744 = vlaneseq
        %v745 = vshrl.u32 %v744, 7
        %v746 = vsub.s32 0, %v745
        %v747 = vrot.slane %v742, %v746
        %v750 = vsel %vm619, %v708, 0
        %752 = vmatprep.subr.mxu0 0.0
        %753 = vmatpush1.msra.mxu0 0.0
        %754 = vmatprep.subr.mxu0 0.0
        %755 = vmatpush1.msra.mxu0 0.0
        %756 = vmatprep.subr.mxu0 0.0
        %757 = vmatpush1.msra.mxu0 0.0
        %758 = vmatprep.subr.mxu0 0.0
        %759 = vmatpush1.msra.mxu0 0.0
        %760 = vmatprep.subr.mxu0 0.0
        %761 = vmatpush1.msra.mxu0 0.0
        %762 = vmatprep.subr.mxu0 0.0
        %763 = vmatpush1.msra.mxu0 0.0
        %764 = vmatprep.subr.mxu0 0.0
        %765 = vmatpush1.msra.mxu0 0.0
        %766 = vmatprep.subr.mxu0 0.0
        %767 = vmatpush1.msra.mxu0 0.0
        %768 = vmatprep.subr.mxu0 0.0
        %769 = vmatpush1.msra.mxu0 0.0
        %770 = vmatprep.subr.mxu0 0.0
        %771 = vmatpush1.msra.mxu0 0.0
        %772 = vmatprep.subr.mxu0 0.0
        %773 = vmatpush1.msra.mxu0 0.0
        %774 = vmatprep.subr.mxu0 0.0
        %775 = vmatpush1.msra.mxu0 0.0
        %776 = vmatprep.subr.mxu0 0.0
        %777 = vmatpush1.msra.mxu0 %v741
        %778 = vmatprep.subr.mxu0 0.0
        %779 = vmatpush1.msra.mxu0 %v740
        %780 = vmatprep.subr.mxu0 0.0
        %781 = vmatpush1.msra.mxu0 %v739
        %782 = vmatprep.subr.mxu0 0.0
        %783 = vmatpush1.msra.mxu0 %v738
        %784 = vmatprep.subr.mxu0 0.0
        %785 = vmatpush2.msra.mxu0 0.0
        %786 = vmatprep.subr.mxu0 0.0
        %787 = vmatpush2.msra.mxu0 0.0
        %788 = vmatprep.subr.mxu0 0.0
        %789 = vmatpush2.msra.mxu0 0.0
        %790 = vmatprep.subr.mxu0 0.0
        %791 = vmatpush2.msra.mxu0 0.0
        %792 = vmatprep.subr.mxu0 0.0
        %793 = vmatpush2.msra.mxu0 0.0
        %794 = vmatprep.subr.mxu0 0.0
        %795 = vmatpush2.msra.mxu0 0.0
        %796 = vmatprep.subr.mxu0 0.0
        %797 = vmatpush2.msra.mxu0 0.0
        %798 = vmatprep.subr.mxu0 0.0
        %799 = vmatpush2.msra.mxu0 0.0
        %800 = vmatprep.subr.mxu0 0.0
        %801 = vmatpush2.msra.mxu0 0.0
        %802 = vmatprep.subr.mxu0 0.0
        %803 = vmatpush2.msra.mxu0 0.0
        %804 = vmatprep.subr.mxu0 0.0
        %805 = vmatpush2.msra.mxu0 0.0
        %806 = vmatprep.subr.mxu0 0.0
        %807 = vmatpush2.msra.mxu0 0.0
        %808 = vmatprep.subr.mxu0 0.0
        %809 = vmatpush2.msra.mxu0 0.0
        %810 = vmatprep.subr.mxu0 0.0
        %811 = vmatpush2.msra.mxu0 0.0
        %812 = vmatprep.subr.mxu0 0.0
        %813 = vmatpush2.msra.mxu0 0.0
        %814 = vmatprep.subr.mxu0 0.0
        %815 = vmatpush2.msra.mxu0 0.0
        %816 = vmatprep.mubr.f32.mxu0 0.0
        %817 = vmatmul.mubr.f32.gmra.mxu0 %v750
        %v818 = vpop.f32.mrf.mxu0
        %v819 = vadd.f32 %v747, %v818
        %v820 = vpop.f32.mrf.mxu0
        %821 = vdwg.mxu0
        %v822 = vld [vmem:[%s8] sm:$0xff]
        %v823 = vld [vmem:[%s8 + $0x8] sm:$0xff]
        %v824 = vld [vmem:[%s8 + $0x10] sm:$0xff]
        %v825 = vld [vmem:[%s8 + $0x18] sm:$0xff]
        %v826 = vld [vmem:[%s9] sm:$0x1]
        %v828 = vlaneseq
        %v829 = vshrl.u32 %v828, 7
        %v830 = vsub.s32 0, %v829
        %v831 = vrot.slane %v826, %v830
        %v834 = vsel %vm619, %v736, 0
        %v837 = vsel %vm619, %v737, 0
        %839 = vmatprep.subr.mxu0 0.0
        %840 = vmatpush1.msra.mxu0 0.0
        %841 = vmatprep.subr.mxu0 0.0
        %842 = vmatpush1.msra.mxu0 0.0
        %843 = vmatprep.subr.mxu0 0.0
        %844 = vmatpush1.msra.mxu0 0.0
        %845 = vmatprep.subr.mxu0 0.0
        %846 = vmatpush1.msra.mxu0 0.0
        %847 = vmatprep.subr.mxu0 0.0
        %848 = vmatpush1.msra.mxu0 0.0
        %849 = vmatprep.subr.mxu0 0.0
        %850 = vmatpush1.msra.mxu0 0.0
        %851 = vmatprep.subr.mxu0 0.0
        %852 = vmatpush1.msra.mxu0 0.0
        %853 = vmatprep.subr.mxu0 0.0
        %854 = vmatpush1.msra.mxu0 0.0
        %855 = vmatprep.subr.mxu0 0.0
        %856 = vmatpush1.msra.mxu0 0.0
        %857 = vmatprep.subr.mxu0 0.0
        %858 = vmatpush1.msra.mxu0 0.0
        %859 = vmatprep.subr.mxu0 0.0
        %860 = vmatpush1.msra.mxu0 0.0
        %861 = vmatprep.subr.mxu0 0.0
        %862 = vmatpush1.msra.mxu0 0.0
        %863 = vmatprep.subr.mxu0 0.0
        %864 = vmatpush1.msra.mxu0 %v825
        %865 = vmatprep.subr.mxu0 0.0
        %866 = vmatpush1.msra.mxu0 %v824
        %867 = vmatprep.subr.mxu0 0.0
        %868 = vmatpush1.msra.mxu0 %v823
        %869 = vmatprep.subr.mxu0 0.0
        %870 = vmatpush1.msra.mxu0 %v822
        %871 = vmatprep.subr.mxu0 0.0
        %872 = vmatpush2.msra.mxu0 0.0
        %873 = vmatprep.subr.mxu0 0.0
        %874 = vmatpush2.msra.mxu0 0.0
        %875 = vmatprep.subr.mxu0 0.0
        %876 = vmatpush2.msra.mxu0 0.0
        %877 = vmatprep.subr.mxu0 0.0
        %878 = vmatpush2.msra.mxu0 0.0
        %879 = vmatprep.subr.mxu0 0.0
        %880 = vmatpush2.msra.mxu0 0.0
        %881 = vmatprep.subr.mxu0 0.0
        %882 = vmatpush2.msra.mxu0 0.0
        %883 = vmatprep.subr.mxu0 0.0
        %884 = vmatpush2.msra.mxu0 0.0
        %885 = vmatprep.subr.mxu0 0.0
        %886 = vmatpush2.msra.mxu0 0.0
        %887 = vmatprep.subr.mxu0 0.0
        %888 = vmatpush2.msra.mxu0 0.0
        %889 = vmatprep.subr.mxu0 0.0
        %890 = vmatpush2.msra.mxu0 0.0
        %891 = vmatprep.subr.mxu0 0.0
        %892 = vmatpush2.msra.mxu0 0.0
        %893 = vmatprep.subr.mxu0 0.0
        %894 = vmatpush2.msra.mxu0 0.0
        %895 = vmatprep.subr.mxu0 0.0
        %896 = vmatpush2.msra.mxu0 0.0
        %897 = vmatprep.subr.mxu0 0.0
        %898 = vmatpush2.msra.mxu0 0.0
        %899 = vmatprep.subr.mxu0 0.0
        %900 = vmatpush2.msra.mxu0 0.0
        %901 = vmatprep.subr.mxu0 0.0
        %902 = vmatpush2.msra.mxu0 0.0
        %903 = vmatprep.mubr.f32.mxu0 0.0
        %904 = vmatmul.mubr.f32.gmra.mxu0 %v834
        %v905 = vpop.f32.mrf.mxu0
        %v906 = vadd.f32 %v831, %v905
        %v907 = vpop.f32.mrf.mxu0
        %908 = vmatprep.mubr.f32.mxu0 0.0
        %909 = vmatmul.mubr.f32.gmra.mxu0 %v837
        %v910 = vpop.f32.mrf.mxu0
        %v911 = vadd.f32 %v831, %v910
        %v912 = vpop.f32.mrf.mxu0
        %913 = vdwg.mxu0
        %v914 = vld [vmem:[%s11] sm:$0x1]
        %v916 = vlaneseq
        %v917 = vshrl.u32 %v916, 7
        %v918 = vsub.s32 0, %v917
        %v919 = vrot.slane %v914, %v918
        %vm921 = vcmask 64512
        %v923 = vsel %vm921, %v819, 0
        %v926 = vsel %vm921, %v906, 0
        %v929 = vsel %vm921, %v911, 0
        %931 = vmatprep.subr.mxu0 0.0
        %932 = vmatpush1.xpose.msra.mxu0 0.0
        %933 = vmatprep.subr.mxu0 0.0
        %934 = vmatpush1.xpose.msra.mxu0 0.0
        %935 = vmatprep.subr.mxu0 0.0
        %936 = vmatpush1.xpose.msra.mxu0 0.0
        %937 = vmatprep.subr.mxu0 0.0
        %938 = vmatpush1.xpose.msra.mxu0 0.0
        %939 = vmatprep.subr.mxu0 0.0
        %940 = vmatpush1.xpose.msra.mxu0 0.0
        %941 = vmatprep.subr.mxu0 0.0
        %942 = vmatpush1.xpose.msra.mxu0 0.0
        %943 = vmatprep.subr.mxu0 0.0
        %944 = vmatpush1.xpose.msra.mxu0 0.0
        %945 = vmatprep.subr.mxu0 0.0
        %946 = vmatpush1.xpose.msra.mxu0 0.0
        %947 = vmatprep.subr.mxu0 0.0
        %948 = vmatpush1.xpose.msra.mxu0 0.0
        %949 = vmatprep.subr.mxu0 0.0
        %950 = vmatpush1.xpose.msra.mxu0 0.0
        %951 = vmatprep.subr.mxu0 0.0
        %952 = vmatpush1.xpose.msra.mxu0 0.0
        %953 = vmatprep.subr.mxu0 0.0
        %954 = vmatpush1.xpose.msra.mxu0 0.0
        %955 = vmatprep.subr.mxu0 0.0
        %956 = vmatpush1.xpose.msra.mxu0 0.0
        %957 = vmatprep.subr.mxu0 0.0
        %958 = vmatpush1.xpose.msra.mxu0 0.0
        %959 = vmatprep.subr.mxu0 0.0
        %960 = vmatpush1.xpose.msra.mxu0 %v929
        %961 = vmatprep.subr.mxu0 0.0
        %962 = vmatpush1.xpose.msra.mxu0 %v926
        %963 = vmatprep.subr.mxu0 0.0
        %964 = vmatpush2.xpose.msra.mxu0 0.0
        %965 = vmatprep.subr.mxu0 0.0
        %966 = vmatpush2.xpose.msra.mxu0 0.0
        %967 = vmatprep.subr.mxu0 0.0
        %968 = vmatpush2.xpose.msra.mxu0 0.0
        %969 = vmatprep.subr.mxu0 0.0
        %970 = vmatpush2.xpose.msra.mxu0 0.0
        %971 = vmatprep.subr.mxu0 0.0
        %972 = vmatpush2.xpose.msra.mxu0 0.0
        %973 = vmatprep.subr.mxu0 0.0
        %974 = vmatpush2.xpose.msra.mxu0 0.0
        %975 = vmatprep.subr.mxu0 0.0
        %976 = vmatpush2.xpose.msra.mxu0 0.0
        %977 = vmatprep.subr.mxu0 0.0
        %978 = vmatpush2.xpose.msra.mxu0 0.0
        %979 = vmatprep.subr.mxu0 0.0
        %980 = vmatpush2.xpose.msra.mxu0 0.0
        %981 = vmatprep.subr.mxu0 0.0
        %982 = vmatpush2.xpose.msra.mxu0 0.0
        %983 = vmatprep.subr.mxu0 0.0
        %984 = vmatpush2.xpose.msra.mxu0 0.0
        %985 = vmatprep.subr.mxu0 0.0
        %986 = vmatpush2.xpose.msra.mxu0 0.0
        %987 = vmatprep.subr.mxu0 0.0
        %988 = vmatpush2.xpose.msra.mxu0 0.0
        %989 = vmatprep.subr.mxu0 0.0
        %990 = vmatpush2.xpose.msra.mxu0 0.0
        %991 = vmatprep.subr.mxu0 0.0
        %992 = vmatpush2.xpose.msra.mxu0 0.0
        %993 = vmatprep.subr.mxu0 0.0
        %994 = vmatpush2.xpose.msra.mxu0 0.0
        %995 = vmatprep.mubr.f32.mxu0 0.0
        %996 = vmatmul.mubr.f32.gmra.mxu0 %v923
        %v997 = vpop.f32.mrf.mxu0
        %v998 = vadd.f32 0.0, %v997
        %v999 = vpop.f32.mrf.mxu0
        %1000 = vdwg.mxu0
        %v1001 = vmul.f32 %v998, 0.35355338
        %vm1002 = vcmask 130048
        %v1003 = vsel %vm1002, %v1001, -inf
        %1004 = vmax.xlane.f32.xlu0 %v1003
        %v1005 = vpop.xlane.xlu0 %1004
        %v1006 = vsub.f32 %v1001, %v1005
        %v1007 = vmul.f32 %v1006, 1.442695
        %v1008 = vpow.pop %v1007
        %v1009 = vsel %vm1002, %v1008, 0.0
        %1010 = vadd.xlane.f32.xlu0 %v1009
        %v1011 = vpop.xlane.xlu0 %1010
        %v1012 = vrcp.pop %v1011
        %v1013 = vmul.f32 %v1008, %v1012
        %1014 = vrot.lane.b32.xlu0 %v906, 96
        %v1015 = vpop.permute.xlu0 %1014
        %1016 = vrot.lane.b32.xlu0 %v911, 96
        %v1017 = vpop.permute.xlu0 %1016
        %v1021 = vsel %vm1002, %v1013, 0
        %1023 = vmatprep.subr.mxu0 0.0
        %1024 = vmatpush1.msra.mxu0 0.0
        %1025 = vmatprep.subr.mxu0 0.0
        %1026 = vmatpush1.msra.mxu0 0.0
        %1027 = vmatprep.subr.mxu0 0.0
        %1028 = vmatpush1.msra.mxu0 0.0
        %1029 = vmatprep.subr.mxu0 0.0
        %1030 = vmatpush1.msra.mxu0 0.0
        %1031 = vmatprep.subr.mxu0 0.0
        %1032 = vmatpush1.msra.mxu0 0.0
        %1033 = vmatprep.subr.mxu0 0.0
        %1034 = vmatpush1.msra.mxu0 0.0
        %1035 = vmatprep.subr.mxu0 0.0
        %1036 = vmatpush1.msra.mxu0 0.0
        %1037 = vmatprep.subr.mxu0 0.0
        %1038 = vmatpush1.msra.mxu0 0.0
        %1039 = vmatprep.subr.mxu0 0.0
        %1040 = vmatpush1.msra.mxu0 0.0
        %1041 = vmatprep.subr.mxu0 0.0
        %1042 = vmatpush1.msra.mxu0 0.0
        %1043 = vmatprep.subr.mxu0 0.0
        %1044 = vmatpush1.msra.mxu0 0.0
        %1045 = vmatprep.subr.mxu0 0.0
        %1046 = vmatpush1.msra.mxu0 0.0
        %1047 = vmatprep.subr.mxu0 0.0
        %1048 = vmatpush1.msra.mxu0 0.0
        %1049 = vmatprep.subr.mxu0 0.0
        %1050 = vmatpush1.msra.mxu0 0.0
        %1051 = vmatprep.subr.mxu0 0.0
        %1052 = vmatpush1.msra.mxu0 %v1017
        %1053 = vmatprep.subr.mxu0 0.0
        %1054 = vmatpush1.msra.mxu0 %v1015
        %1055 = vmatprep.subr.mxu0 0.0
        %1056 = vmatpush2.msra.mxu0 0.0
        %1057 = vmatprep.subr.mxu0 0.0
        %1058 = vmatpush2.msra.mxu0 0.0
        %1059 = vmatprep.subr.mxu0 0.0
        %1060 = vmatpush2.msra.mxu0 0.0
        %1061 = vmatprep.subr.mxu0 0.0
        %1062 = vmatpush2.msra.mxu0 0.0
        %1063 = vmatprep.subr.mxu0 0.0
        %1064 = vmatpush2.msra.mxu0 0.0
        %1065 = vmatprep.subr.mxu0 0.0
        %1066 = vmatpush2.msra.mxu0 0.0
        %1067 = vmatprep.subr.mxu0 0.0
        %1068 = vmatpush2.msra.mxu0 0.0
        %1069 = vmatprep.subr.mxu0 0.0
        %1070 = vmatpush2.msra.mxu0 0.0
        %1071 = vmatprep.subr.mxu0 0.0
        %1072 = vmatpush2.msra.mxu0 0.0
        %1073 = vmatprep.subr.mxu0 0.0
        %1074 = vmatpush2.msra.mxu0 0.0
        %1075 = vmatprep.subr.mxu0 0.0
        %1076 = vmatpush2.msra.mxu0 0.0
        %1077 = vmatprep.subr.mxu0 0.0
        %1078 = vmatpush2.msra.mxu0 0.0
        %1079 = vmatprep.subr.mxu0 0.0
        %1080 = vmatpush2.msra.mxu0 0.0
        %1081 = vmatprep.subr.mxu0 0.0
        %1082 = vmatpush2.msra.mxu0 0.0
        %1083 = vmatprep.subr.mxu0 0.0
        %1084 = vmatpush2.msra.mxu0 0.0
        %1085 = vmatprep.subr.mxu0 0.0
        %1086 = vmatpush2.msra.mxu0 0.0
        %1087 = vmatprep.mubr.f32.mxu0 0.0
        %1088 = vmatmul.mubr.f32.gmra.mxu0 %v1021
        %v1089 = vpop.f32.mrf.mxu0
        %v1090 = vadd.f32 0.0, %v1089
        %v1091 = vpop.f32.mrf.mxu0
        %1092 = vdwg.mxu0
        %v1093 = vld [vmem:[#allocation7] sm:$0xff]
        %v1095 = vsel %vm921, %v1090, 0
        %1097 = vmatprep.subr.mxu0 0.0
        %1098 = vmatpush1.msra.mxu0 0.0
        %1099 = vmatprep.subr.mxu0 0.0
        %1100 = vmatpush1.msra.mxu0 0.0
        %1101 = vmatprep.subr.mxu0 0.0
        %1102 = vmatpush1.msra.mxu0 0.0
        %1103 = vmatprep.subr.mxu0 0.0
        %1104 = vmatpush1.msra.mxu0 0.0
        %1105 = vmatprep.subr.mxu0 0.0
        %1106 = vmatpush1.msra.mxu0 0.0
        %1107 = vmatprep.subr.mxu0 0.0
        %1108 = vmatpush1.msra.mxu0 0.0
        %1109 = vmatprep.subr.mxu0 0.0
        %1110 = vmatpush1.msra.mxu0 0.0
        %1111 = vmatprep.subr.mxu0 0.0
        %1112 = vmatpush1.msra.mxu0 0.0
        %1113 = vmatprep.subr.mxu0 0.0
        %1114 = vmatpush1.msra.mxu0 0.0
        %1115 = vmatprep.subr.mxu0 0.0
        %1116 = vmatpush1.msra.mxu0 0.0
        %1117 = vmatprep.subr.mxu0 0.0
        %1118 = vmatpush1.msra.mxu0 0.0
        %1119 = vmatprep.subr.mxu0 0.0
        %1120 = vmatpush1.msra.mxu0 0.0
        %1121 = vmatprep.subr.mxu0 0.0
        %1122 = vmatpush1.msra.mxu0 0.0
        %1123 = vmatprep.subr.mxu0 0.0
        %1124 = vmatpush1.msra.mxu0 0.0
        %1125 = vmatprep.subr.mxu0 0.0
        %1126 = vmatpush1.msra.mxu0 0.0
        %1127 = vmatprep.subr.mxu0 0.0
        %1128 = vmatpush1.msra.mxu0 %v1093
        %1129 = vmatprep.subr.mxu0 0.0
        %1130 = vmatpush2.msra.mxu0 0.0
        %1131 = vmatprep.subr.mxu0 0.0
        %1132 = vmatpush2.msra.mxu0 0.0
        %1133 = vmatprep.subr.mxu0 0.0
        %1134 = vmatpush2.msra.mxu0 0.0
        %1135 = vmatprep.subr.mxu0 0.0
        %1136 = vmatpush2.msra.mxu0 0.0
        %1137 = vmatprep.subr.mxu0 0.0
        %1138 = vmatpush2.msra.mxu0 0.0
        %1139 = vmatprep.subr.mxu0 0.0
        %1140 = vmatpush2.msra.mxu0 0.0
        %1141 = vmatprep.subr.mxu0 0.0
        %1142 = vmatpush2.msra.mxu0 0.0
        %1143 = vmatprep.subr.mxu0 0.0
        %1144 = vmatpush2.msra.mxu0 0.0
        %1145 = vmatprep.subr.mxu0 0.0
        %1146 = vmatpush2.msra.mxu0 0.0
        %1147 = vmatprep.subr.mxu0 0.0
        %1148 = vmatpush2.msra.mxu0 0.0
        %1149 = vmatprep.subr.mxu0 0.0
        %1150 = vmatpush2.msra.mxu0 0.0
        %1151 = vmatprep.subr.mxu0 0.0
        %1152 = vmatpush2.msra.mxu0 0.0
        %1153 = vmatprep.subr.mxu0 0.0
        %1154 = vmatpush2.msra.mxu0 0.0
        %1155 = vmatprep.subr.mxu0 0.0
        %1156 = vmatpush2.msra.mxu0 0.0
        %1157 = vmatprep.subr.mxu0 0.0
        %1158 = vmatpush2.msra.mxu0 0.0
        %1159 = vmatprep.subr.mxu0 0.0
        %1160 = vmatpush2.msra.mxu0 0.0
        %1161 = vmatprep.mubr.f32.mxu0 0.0
        %1162 = vmatmul.mubr.f32.gmra.mxu0 %v1095
        %v1163 = vpop.f32.mrf.mxu0
        %v1164 = vadd.f32 0.0, %v1163
        %v1165 = vpop.f32.mrf.mxu0
        %1166 = vdwg.mxu0
        %v1167 = vadd.f32 %v919, %v1164
        %1168 = vrot.lane.b32.xlu0 %v819, 120
        %v1169 = vpop.permute.xlu0 %1168
        %1170 = vrot.lane.b32.xlu0 %v906, 120
        %v1171 = vpop.permute.xlu0 %1170
        %1172 = vrot.lane.b32.xlu0 %v911, 120
        %v1173 = vpop.permute.xlu0 %1172
        %v1174 = vsel %vm921, %v1169, 0
        %v1176 = vsel %vm921, %v1171, 0
        %v1178 = vsel %vm921, %v1173, 0
        %1180 = vmatprep.subr.mxu0 0.0
        %1181 = vmatpush1.xpose.msra.mxu0 0.0
        %1182 = vmatprep.subr.mxu0 0.0
        %1183 = vmatpush1.xpose.msra.mxu0 0.0
        %1184 = vmatprep.subr.mxu0 0.0
        %1185 = vmatpush1.xpose.msra.mxu0 0.0
        %1186 = vmatprep.subr.mxu0 0.0
        %1187 = vmatpush1.xpose.msra.mxu0 0.0
        %1188 = vmatprep.subr.mxu0 0.0
        %1189 = vmatpush1.xpose.msra.mxu0 0.0
        %1190 = vmatprep.subr.mxu0 0.0
        %1191 = vmatpush1.xpose.msra.mxu0 0.0
        %1192 = vmatprep.subr.mxu0 0.0
        %1193 = vmatpush1.xpose.msra.mxu0 0.0
        %1194 = vmatprep.subr.mxu0 0.0
        %1195 = vmatpush1.xpose.msra.mxu0 0.0
        %1196 = vmatprep.subr.mxu0 0.0
        %1197 = vmatpush1.xpose.msra.mxu0 0.0
        %1198 = vmatprep.subr.mxu0 0.0
        %1199 = vmatpush1.xpose.msra.mxu0 0.0
        %1200 = vmatprep.subr.mxu0 0.0
        %1201 = vmatpush1.xpose.msra.mxu0 0.0
        %1202 = vmatprep.subr.mxu0 0.0
        %1203 = vmatpush1.xpose.msra.mxu0 0.0
        %1204 = vmatprep.subr.mxu0 0.0
        %1205 = vmatpush1.xpose.msra.mxu0 0.0
        %1206 = vmatprep.subr.mxu0 0.0
        %1207 = vmatpush1.xpose.msra.mxu0 0.0
        %1208 = vmatprep.subr.mxu0 0.0
        %1209 = vmatpush1.xpose.msra.mxu0 %v1178
        %1210 = vmatprep.subr.mxu0 0.0
        %1211 = vmatpush1.xpose.msra.mxu0 %v1176
        %1212 = vmatprep.subr.mxu0 0.0
        %1213 = vmatpush2.xpose.msra.mxu0 0.0
        %1214 = vmatprep.subr.mxu0 0.0
        %1215 = vmatpush2.xpose.msra.mxu0 0.0
        %1216 = vmatprep.subr.mxu0 0.0
        %1217 = vmatpush2.xpose.msra.mxu0 0.0
        %1218 = vmatprep.subr.mxu0 0.0
        %1219 = vmatpush2.xpose.msra.mxu0 0.0
        %1220 = vmatprep.subr.mxu0 0.0
        %1221 = vmatpush2.xpose.msra.mxu0 0.0
        %1222 = vmatprep.subr.mxu0 0.0
        %1223 = vmatpush2.xpose.msra.mxu0 0.0
        %1224 = vmatprep.subr.mxu0 0.0
        %1225 = vmatpush2.xpose.msra.mxu0 0.0
        %1226 = vmatprep.subr.mxu0 0.0
        %1227 = vmatpush2.xpose.msra.mxu0 0.0
        %1228 = vmatprep.subr.mxu0 0.0
        %1229 = vmatpush2.xpose.msra.mxu0 0.0
        %1230 = vmatprep.subr.mxu0 0.0
        %1231 = vmatpush2.xpose.msra.mxu0 0.0
        %1232 = vmatprep.subr.mxu0 0.0
        %1233 = vmatpush2.xpose.msra.mxu0 0.0
        %1234 = vmatprep.subr.mxu0 0.0
        %1235 = vmatpush2.xpose.msra.mxu0 0.0
        %1236 = vmatprep.subr.mxu0 0.0
        %1237 = vmatpush2.xpose.msra.mxu0 0.0
        %1238 = vmatprep.subr.mxu0 0.0
        %1239 = vmatpush2.xpose.msra.mxu0 0.0
        %1240 = vmatprep.subr.mxu0 0.0
        %1241 = vmatpush2.xpose.msra.mxu0 0.0
        %1242 = vmatprep.subr.mxu0 0.0
        %1243 = vmatpush2.xpose.msra.mxu0 0.0
        %1244 = vmatprep.mubr.f32.mxu0 0.0
        %1245 = vmatmul.mubr.f32.gmra.mxu0 %v1174
        %v1246 = vpop.f32.mrf.mxu0
        %v1247 = vadd.f32 0.0, %v1246
        %v1248 = vpop.f32.mrf.mxu0
        %1249 = vdwg.mxu0
        %v1250 = vmul.f32 %v1247, 0.35355338
        %v1251 = vsel %vm1002, %v1250, -inf
        %1252 = vmax.xlane.f32.xlu0 %v1251
        %v1253 = vpop.xlane.xlu0 %1252
        %v1254 = vsub.f32 %v1250, %v1253
        %v1255 = vmul.f32 %v1254, 1.442695
        %v1256 = vpow.pop %v1255
        %v1257 = vsel %vm1002, %v1256, 0.0
        %1258 = vadd.xlane.f32.xlu0 %v1257
        %v1259 = vpop.xlane.xlu0 %1258
        %v1260 = vrcp.pop %v1259
        %v1261 = vmul.f32 %v1256, %v1260
        %1262 = vrot.lane.b32.xlu0 %v906, 88
        %v1263 = vpop.permute.xlu0 %1262
        %1264 = vrot.lane.b32.xlu0 %v911, 88
        %v1265 = vpop.permute.xlu0 %1264
        %v1269 = vsel %vm1002, %v1261, 0
        %1271 = vmatprep.subr.mxu0 0.0
        %1272 = vmatpush1.msra.mxu0 0.0
        %1273 = vmatprep.subr.mxu0 0.0
        %1274 = vmatpush1.msra.mxu0 0.0
        %1275 = vmatprep.subr.mxu0 0.0
        %1276 = vmatpush1.msra.mxu0 0.0
        %1277 = vmatprep.subr.mxu0 0.0
        %1278 = vmatpush1.msra.mxu0 0.0
        %1279 = vmatprep.subr.mxu0 0.0
        %1280 = vmatpush1.msra.mxu0 0.0
        %1281 = vmatprep.subr.mxu0 0.0
        %1282 = vmatpush1.msra.mxu0 0.0
        %1283 = vmatprep.subr.mxu0 0.0
        %1284 = vmatpush1.msra.mxu0 0.0
        %1285 = vmatprep.subr.mxu0 0.0
        %1286 = vmatpush1.msra.mxu0 0.0
        %1287 = vmatprep.subr.mxu0 0.0
        %1288 = vmatpush1.msra.mxu0 0.0
        %1289 = vmatprep.subr.mxu0 0.0
        %1290 = vmatpush1.msra.mxu0 0.0
        %1291 = vmatprep.subr.mxu0 0.0
        %1292 = vmatpush1.msra.mxu0 0.0
        %1293 = vmatprep.subr.mxu0 0.0
        %1294 = vmatpush1.msra.mxu0 0.0
        %1295 = vmatprep.subr.mxu0 0.0
        %1296 = vmatpush1.msra.mxu0 0.0
        %1297 = vmatprep.subr.mxu0 0.0
        %1298 = vmatpush1.msra.mxu0 0.0
        %1299 = vmatprep.subr.mxu0 0.0
        %1300 = vmatpush1.msra.mxu0 %v1265
        %1301 = vmatprep.subr.mxu0 0.0
        %1302 = vmatpush1.msra.mxu0 %v1263
        %1303 = vmatprep.subr.mxu0 0.0
        %1304 = vmatpush2.msra.mxu0 0.0
        %1305 = vmatprep.subr.mxu0 0.0
        %1306 = vmatpush2.msra.mxu0 0.0
        %1307 = vmatprep.subr.mxu0 0.0
        %1308 = vmatpush2.msra.mxu0 0.0
        %1309 = vmatprep.subr.mxu0 0.0
        %1310 = vmatpush2.msra.mxu0 0.0
        %1311 = vmatprep.subr.mxu0 0.0
        %1312 = vmatpush2.msra.mxu0 0.0
        %1313 = vmatprep.subr.mxu0 0.0
        %1314 = vmatpush2.msra.mxu0 0.0
        %1315 = vmatprep.subr.mxu0 0.0
        %1316 = vmatpush2.msra.mxu0 0.0
        %1317 = vmatprep.subr.mxu0 0.0
        %1318 = vmatpush2.msra.mxu0 0.0
        %1319 = vmatprep.subr.mxu0 0.0
        %1320 = vmatpush2.msra.mxu0 0.0
        %1321 = vmatprep.subr.mxu0 0.0
        %1322 = vmatpush2.msra.mxu0 0.0
        %1323 = vmatprep.subr.mxu0 0.0
        %1324 = vmatpush2.msra.mxu0 0.0
        %1325 = vmatprep.subr.mxu0 0.0
        %1326 = vmatpush2.msra.mxu0 0.0
        %1327 = vmatprep.subr.mxu0 0.0
        %1328 = vmatpush2.msra.mxu0 0.0
        %1329 = vmatprep.subr.mxu0 0.0
        %1330 = vmatpush2.msra.mxu0 0.0
        %1331 = vmatprep.subr.mxu0 0.0
        %1332 = vmatpush2.msra.mxu0 0.0
        %1333 = vmatprep.subr.mxu0 0.0
        %1334 = vmatpush2.msra.mxu0 0.0
        %1335 = vmatprep.mubr.f32.mxu0 0.0
        %1336 = vmatmul.mubr.f32.gmra.mxu0 %v1269
        %v1337 = vpop.f32.mrf.mxu0
        %v1338 = vadd.f32 0.0, %v1337
        %v1339 = vpop.f32.mrf.mxu0
        %1340 = vdwg.mxu0
        %s1341 = scalar_lea.vmem [#allocation7], 8
        %v1342 = vld [vmem:[%s1341] sm:$0xff]
        %v1344 = vsel %vm921, %v1338, 0
        %1346 = vmatprep.subr.mxu0 0.0
        %1347 = vmatpush1.msra.mxu0 0.0
        %1348 = vmatprep.subr.mxu0 0.0
        %1349 = vmatpush1.msra.mxu0 0.0
        %1350 = vmatprep.subr.mxu0 0.0
        %1351 = vmatpush1.msra.mxu0 0.0
        %1352 = vmatprep.subr.mxu0 0.0
        %1353 = vmatpush1.msra.mxu0 0.0
        %1354 = vmatprep.subr.mxu0 0.0
        %1355 = vmatpush1.msra.mxu0 0.0
        %1356 = vmatprep.subr.mxu0 0.0
        %1357 = vmatpush1.msra.mxu0 0.0
        %1358 = vmatprep.subr.mxu0 0.0
        %1359 = vmatpush1.msra.mxu0 0.0
        %1360 = vmatprep.subr.mxu0 0.0
        %1361 = vmatpush1.msra.mxu0 0.0
        %1362 = vmatprep.subr.mxu0 0.0
        %1363 = vmatpush1.msra.mxu0 0.0
        %1364 = vmatprep.subr.mxu0 0.0
        %1365 = vmatpush1.msra.mxu0 0.0
        %1366 = vmatprep.subr.mxu0 0.0
        %1367 = vmatpush1.msra.mxu0 0.0
        %1368 = vmatprep.subr.mxu0 0.0
        %1369 = vmatpush1.msra.mxu0 0.0
        %1370 = vmatprep.subr.mxu0 0.0
        %1371 = vmatpush1.msra.mxu0 0.0
        %1372 = vmatprep.subr.mxu0 0.0
        %1373 = vmatpush1.msra.mxu0 0.0
        %1374 = vmatprep.subr.mxu0 0.0
        %1375 = vmatpush1.msra.mxu0 0.0
        %1376 = vmatprep.subr.mxu0 0.0
        %1377 = vmatpush1.msra.mxu0 %v1342
        %1378 = vmatprep.subr.mxu0 0.0
        %1379 = vmatpush2.msra.mxu0 0.0
        %1380 = vmatprep.subr.mxu0 0.0
        %1381 = vmatpush2.msra.mxu0 0.0
        %1382 = vmatprep.subr.mxu0 0.0
        %1383 = vmatpush2.msra.mxu0 0.0
        %1384 = vmatprep.subr.mxu0 0.0
        %1385 = vmatpush2.msra.mxu0 0.0
        %1386 = vmatprep.subr.mxu0 0.0
        %1387 = vmatpush2.msra.mxu0 0.0
        %1388 = vmatprep.subr.mxu0 0.0
        %1389 = vmatpush2.msra.mxu0 0.0
        %1390 = vmatprep.subr.mxu0 0.0
        %1391 = vmatpush2.msra.mxu0 0.0
        %1392 = vmatprep.subr.mxu0 0.0
        %1393 = vmatpush2.msra.mxu0 0.0
        %1394 = vmatprep.subr.mxu0 0.0
        %1395 = vmatpush2.msra.mxu0 0.0
        %1396 = vmatprep.subr.mxu0 0.0
        %1397 = vmatpush2.msra.mxu0 0.0
        %1398 = vmatprep.subr.mxu0 0.0
        %1399 = vmatpush2.msra.mxu0 0.0
        %1400 = vmatprep.subr.mxu0 0.0
        %1401 = vmatpush2.msra.mxu0 0.0
        %1402 = vmatprep.subr.mxu0 0.0
        %1403 = vmatpush2.msra.mxu0 0.0
        %1404 = vmatprep.subr.mxu0 0.0
        %1405 = vmatpush2.msra.mxu0 0.0
        %1406 = vmatprep.subr.mxu0 0.0
        %1407 = vmatpush2.msra.mxu0 0.0
        %1408 = vmatprep.subr.mxu0 0.0
        %1409 = vmatpush2.msra.mxu0 0.0
        %1410 = vmatprep.mubr.f32.mxu0 0.0
        %1411 = vmatmul.mubr.f32.gmra.mxu0 %v1344
        %v1412 = vpop.f32.mrf.mxu0
        %v1413 = vadd.f32 0.0, %v1412
        %v1414 = vpop.f32.mrf.mxu0
        %1415 = vdwg.mxu0
        %v1416 = vadd.f32 %v1167, %v1413
        %1417 = vrot.lane.b32.xlu0 %v819, 112
        %v1418 = vpop.permute.xlu0 %1417
        %1419 = vrot.lane.b32.xlu0 %v906, 112
        %v1420 = vpop.permute.xlu0 %1419
        %1421 = vrot.lane.b32.xlu0 %v911, 112
        %v1422 = vpop.permute.xlu0 %1421
        %v1423 = vsel %vm921, %v1418, 0
        %v1425 = vsel %vm921, %v1420, 0
        %v1427 = vsel %vm921, %v1422, 0
        %1429 = vmatprep.subr.mxu0 0.0
        %1430 = vmatpush1.xpose.msra.mxu0 0.0
        %1431 = vmatprep.subr.mxu0 0.0
        %1432 = vmatpush1.xpose.msra.mxu0 0.0
        %1433 = vmatprep.subr.mxu0 0.0
        %1434 = vmatpush1.xpose.msra.mxu0 0.0
        %1435 = vmatprep.subr.mxu0 0.0
        %1436 = vmatpush1.xpose.msra.mxu0 0.0
        %1437 = vmatprep.subr.mxu0 0.0
        %1438 = vmatpush1.xpose.msra.mxu0 0.0
        %1439 = vmatprep.subr.mxu0 0.0
        %1440 = vmatpush1.xpose.msra.mxu0 0.0
        %1441 = vmatprep.subr.mxu0 0.0
        %1442 = vmatpush1.xpose.msra.mxu0 0.0
        %1443 = vmatprep.subr.mxu0 0.0
        %1444 = vmatpush1.xpose.msra.mxu0 0.0
        %1445 = vmatprep.subr.mxu0 0.0
        %1446 = vmatpush1.xpose.msra.mxu0 0.0
        %1447 = vmatprep.subr.mxu0 0.0
        %1448 = vmatpush1.xpose.msra.mxu0 0.0
        %1449 = vmatprep.subr.mxu0 0.0
        %1450 = vmatpush1.xpose.msra.mxu0 0.0
        %1451 = vmatprep.subr.mxu0 0.0
        %1452 = vmatpush1.xpose.msra.mxu0 0.0
        %1453 = vmatprep.subr.mxu0 0.0
        %1454 = vmatpush1.xpose.msra.mxu0 0.0
        %1455 = vmatprep.subr.mxu0 0.0
        %1456 = vmatpush1.xpose.msra.mxu0 0.0
        %1457 = vmatprep.subr.mxu0 0.0
        %1458 = vmatpush1.xpose.msra.mxu0 %v1427
        %1459 = vmatprep.subr.mxu0 0.0
        %1460 = vmatpush1.xpose.msra.mxu0 %v1425
        %1461 = vmatprep.subr.mxu0 0.0
        %1462 = vmatpush2.xpose.msra.mxu0 0.0
        %1463 = vmatprep.subr.mxu0 0.0
        %1464 = vmatpush2.xpose.msra.mxu0 0.0
        %1465 = vmatprep.subr.mxu0 0.0
        %1466 = vmatpush2.xpose.msra.mxu0 0.0
        %1467 = vmatprep.subr.mxu0 0.0
        %1468 = vmatpush2.xpose.msra.mxu0 0.0
        %1469 = vmatprep.subr.mxu0 0.0
        %1470 = vmatpush2.xpose.msra.mxu0 0.0
        %1471 = vmatprep.subr.mxu0 0.0
        %1472 = vmatpush2.xpose.msra.mxu0 0.0
        %1473 = vmatprep.subr.mxu0 0.0
        %1474 = vmatpush2.xpose.msra.mxu0 0.0
        %1475 = vmatprep.subr.mxu0 0.0
        %1476 = vmatpush2.xpose.msra.mxu0 0.0
        %1477 = vmatprep.subr.mxu0 0.0
        %1478 = vmatpush2.xpose.msra.mxu0 0.0
        %1479 = vmatprep.subr.mxu0 0.0
        %1480 = vmatpush2.xpose.msra.mxu0 0.0
        %1481 = vmatprep.subr.mxu0 0.0
        %1482 = vmatpush2.xpose.msra.mxu0 0.0
        %1483 = vmatprep.subr.mxu0 0.0
        %1484 = vmatpush2.xpose.msra.mxu0 0.0
        %1485 = vmatprep.subr.mxu0 0.0
        %1486 = vmatpush2.xpose.msra.mxu0 0.0
        %1487 = vmatprep.subr.mxu0 0.0
        %1488 = vmatpush2.xpose.msra.mxu0 0.0
        %1489 = vmatprep.subr.mxu0 0.0
        %1490 = vmatpush2.xpose.msra.mxu0 0.0
        %1491 = vmatprep.subr.mxu0 0.0
        %1492 = vmatpush2.xpose.msra.mxu0 0.0
        %1493 = vmatprep.mubr.f32.mxu0 0.0
        %1494 = vmatmul.mubr.f32.gmra.mxu0 %v1423
        %v1495 = vpop.f32.mrf.mxu0
        %v1496 = vadd.f32 0.0, %v1495
        %v1497 = vpop.f32.mrf.mxu0
        %1498 = vdwg.mxu0
        %v1499 = vmul.f32 %v1496, 0.35355338
        %v1500 = vsel %vm1002, %v1499, -inf
        %1501 = vmax.xlane.f32.xlu0 %v1500
        %v1502 = vpop.xlane.xlu0 %1501
        %v1503 = vsub.f32 %v1499, %v1502
        %v1504 = vmul.f32 %v1503, 1.442695
        %v1505 = vpow.pop %v1504
        %v1506 = vsel %vm1002, %v1505, 0.0
        %1507 = vadd.xlane.f32.xlu0 %v1506
        %v1508 = vpop.xlane.xlu0 %1507
        %v1509 = vrcp.pop %v1508
        %v1510 = vmul.f32 %v1505, %v1509
        %1511 = vrot.lane.b32.xlu0 %v906, 80
        %v1512 = vpop.permute.xlu0 %1511
        %1513 = vrot.lane.b32.xlu0 %v911, 80
        %v1514 = vpop.permute.xlu0 %1513
        %v1518 = vsel %vm1002, %v1510, 0
        %1520 = vmatprep.subr.mxu0 0.0
        %1521 = vmatpush1.msra.mxu0 0.0
        %1522 = vmatprep.subr.mxu0 0.0
        %1523 = vmatpush1.msra.mxu0 0.0
        %1524 = vmatprep.subr.mxu0 0.0
        %1525 = vmatpush1.msra.mxu0 0.0
        %1526 = vmatprep.subr.mxu0 0.0
        %1527 = vmatpush1.msra.mxu0 0.0
        %1528 = vmatprep.subr.mxu0 0.0
        %1529 = vmatpush1.msra.mxu0 0.0
        %1530 = vmatprep.subr.mxu0 0.0
        %1531 = vmatpush1.msra.mxu0 0.0
        %1532 = vmatprep.subr.mxu0 0.0
        %1533 = vmatpush1.msra.mxu0 0.0
        %1534 = vmatprep.subr.mxu0 0.0
        %1535 = vmatpush1.msra.mxu0 0.0
        %1536 = vmatprep.subr.mxu0 0.0
        %1537 = vmatpush1.msra.mxu0 0.0
        %1538 = vmatprep.subr.mxu0 0.0
        %1539 = vmatpush1.msra.mxu0 0.0
        %1540 = vmatprep.subr.mxu0 0.0
        %1541 = vmatpush1.msra.mxu0 0.0
        %1542 = vmatprep.subr.mxu0 0.0
        %1543 = vmatpush1.msra.mxu0 0.0
        %1544 = vmatprep.subr.mxu0 0.0
        %1545 = vmatpush1.msra.mxu0 0.0
        %1546 = vmatprep.subr.mxu0 0.0
        %1547 = vmatpush1.msra.mxu0 0.0
        %1548 = vmatprep.subr.mxu0 0.0
        %1549 = vmatpush1.msra.mxu0 %v1514
        %1550 = vmatprep.subr.mxu0 0.0
        %1551 = vmatpush1.msra.mxu0 %v1512
        %1552 = vmatprep.subr.mxu0 0.0
        %1553 = vmatpush2.msra.mxu0 0.0
        %1554 = vmatprep.subr.mxu0 0.0
        %1555 = vmatpush2.msra.mxu0 0.0
        %1556 = vmatprep.subr.mxu0 0.0
        %1557 = vmatpush2.msra.mxu0 0.0
        %1558 = vmatprep.subr.mxu0 0.0
        %1559 = vmatpush2.msra.mxu0 0.0
        %1560 = vmatprep.subr.mxu0 0.0
        %1561 = vmatpush2.msra.mxu0 0.0
        %1562 = vmatprep.subr.mxu0 0.0
        %1563 = vmatpush2.msra.mxu0 0.0
        %1564 = vmatprep.subr.mxu0 0.0
        %1565 = vmatpush2.msra.mxu0 0.0
        %1566 = vmatprep.subr.mxu0 0.0
        %1567 = vmatpush2.msra.mxu0 0.0
        %1568 = vmatprep.subr.mxu0 0.0
        %1569 = vmatpush2.msra.mxu0 0.0
        %1570 = vmatprep.subr.mxu0 0.0
        %1571 = vmatpush2.msra.mxu0 0.0
        %1572 = vmatprep.subr.mxu0 0.0
        %1573 = vmatpush2.msra.mxu0 0.0
        %1574 = vmatprep.subr.mxu0 0.0
        %1575 = vmatpush2.msra.mxu0 0.0
        %1576 = vmatprep.subr.mxu0 0.0
        %1577 = vmatpush2.msra.mxu0 0.0
        %1578 = vmatprep.subr.mxu0 0.0
        %1579 = vmatpush2.msra.mxu0 0.0
        %1580 = vmatprep.subr.mxu0 0.0
        %1581 = vmatpush2.msra.mxu0 0.0
        %1582 = vmatprep.subr.mxu0 0.0
        %1583 = vmatpush2.msra.mxu0 0.0
        %1584 = vmatprep.mubr.f32.mxu0 0.0
        %1585 = vmatmul.mubr.f32.gmra.mxu0 %v1518
        %v1586 = vpop.f32.mrf.mxu0
        %v1587 = vadd.f32 0.0, %v1586
        %v1588 = vpop.f32.mrf.mxu0
        %1589 = vdwg.mxu0
        %s1590 = scalar_lea.vmem [#allocation7], 16
        %v1591 = vld [vmem:[%s1590] sm:$0xff]
        %v1593 = vsel %vm921, %v1587, 0
        %1595 = vmatprep.subr.mxu0 0.0
        %1596 = vmatpush1.msra.mxu0 0.0
        %1597 = vmatprep.subr.mxu0 0.0
        %1598 = vmatpush1.msra.mxu0 0.0
        %1599 = vmatprep.subr.mxu0 0.0
        %1600 = vmatpush1.msra.mxu0 0.0
        %1601 = vmatprep.subr.mxu0 0.0
        %1602 = vmatpush1.msra.mxu0 0.0
        %1603 = vmatprep.subr.mxu0 0.0
        %1604 = vmatpush1.msra.mxu0 0.0
        %1605 = vmatprep.subr.mxu0 0.0
        %1606 = vmatpush1.msra.mxu0 0.0
        %1607 = vmatprep.subr.mxu0 0.0
        %1608 = vmatpush1.msra.mxu0 0.0
        %1609 = vmatprep.subr.mxu0 0.0
        %1610 = vmatpush1.msra.mxu0 0.0
        %1611 = vmatprep.subr.mxu0 0.0
        %1612 = vmatpush1.msra.mxu0 0.0
        %1613 = vmatprep.subr.mxu0 0.0
        %1614 = vmatpush1.msra.mxu0 0.0
        %1615 = vmatprep.subr.mxu0 0.0
        %1616 = vmatpush1.msra.mxu0 0.0
        %1617 = vmatprep.subr.mxu0 0.0
        %1618 = vmatpush1.msra.mxu0 0.0
        %1619 = vmatprep.subr.mxu0 0.0
        %1620 = vmatpush1.msra.mxu0 0.0
        %1621 = vmatprep.subr.mxu0 0.0
        %1622 = vmatpush1.msra.mxu0 0.0
        %1623 = vmatprep.subr.mxu0 0.0
        %1624 = vmatpush1.msra.mxu0 0.0
        %1625 = vmatprep.subr.mxu0 0.0
        %1626 = vmatpush1.msra.mxu0 %v1591
        %1627 = vmatprep.subr.mxu0 0.0
        %1628 = vmatpush2.msra.mxu0 0.0
        %1629 = vmatprep.subr.mxu0 0.0
        %1630 = vmatpush2.msra.mxu0 0.0
        %1631 = vmatprep.subr.mxu0 0.0
        %1632 = vmatpush2.msra.mxu0 0.0
        %1633 = vmatprep.subr.mxu0 0.0
        %1634 = vmatpush2.msra.mxu0 0.0
        %1635 = vmatprep.subr.mxu0 0.0
        %1636 = vmatpush2.msra.mxu0 0.0
        %1637 = vmatprep.subr.mxu0 0.0
        %1638 = vmatpush2.msra.mxu0 0.0
        %1639 = vmatprep.subr.mxu0 0.0
        %1640 = vmatpush2.msra.mxu0 0.0
        %1641 = vmatprep.subr.mxu0 0.0
        %1642 = vmatpush2.msra.mxu0 0.0
        %1643 = vmatprep.subr.mxu0 0.0
        %1644 = vmatpush2.msra.mxu0 0.0
        %1645 = vmatprep.subr.mxu0 0.0
        %1646 = vmatpush2.msra.mxu0 0.0
        %1647 = vmatprep.subr.mxu0 0.0
        %1648 = vmatpush2.msra.mxu0 0.0
        %1649 = vmatprep.subr.mxu0 0.0
        %1650 = vmatpush2.msra.mxu0 0.0
        %1651 = vmatprep.subr.mxu0 0.0
        %1652 = vmatpush2.msra.mxu0 0.0
        %1653 = vmatprep.subr.mxu0 0.0
        %1654 = vmatpush2.msra.mxu0 0.0
        %1655 = vmatprep.subr.mxu0 0.0
        %1656 = vmatpush2.msra.mxu0 0.0
        %1657 = vmatprep.subr.mxu0 0.0
        %1658 = vmatpush2.msra.mxu0 0.0
        %1659 = vmatprep.mubr.f32.mxu0 0.0
        %1660 = vmatmul.mubr.f32.gmra.mxu0 %v1593
        %v1661 = vpop.f32.mrf.mxu0
        %v1662 = vadd.f32 0.0, %v1661
        %v1663 = vpop.f32.mrf.mxu0
        %1664 = vdwg.mxu0
        %v1665 = vadd.f32 %v1416, %v1662
        %1666 = vrot.lane.b32.xlu0 %v819, 104
        %v1667 = vpop.permute.xlu0 %1666
        %1668 = vrot.lane.b32.xlu0 %v906, 104
        %v1669 = vpop.permute.xlu0 %1668
        %1670 = vrot.lane.b32.xlu0 %v911, 104
        %v1671 = vpop.permute.xlu0 %1670
        %v1672 = vsel %vm921, %v1667, 0
        %v1674 = vsel %vm921, %v1669, 0
        %v1676 = vsel %vm921, %v1671, 0
        %1678 = vmatprep.subr.mxu0 0.0
        %1679 = vmatpush1.xpose.msra.mxu0 0.0
        %1680 = vmatprep.subr.mxu0 0.0
        %1681 = vmatpush1.xpose.msra.mxu0 0.0
        %1682 = vmatprep.subr.mxu0 0.0
        %1683 = vmatpush1.xpose.msra.mxu0 0.0
        %1684 = vmatprep.subr.mxu0 0.0
        %1685 = vmatpush1.xpose.msra.mxu0 0.0
        %1686 = vmatprep.subr.mxu0 0.0
        %1687 = vmatpush1.xpose.msra.mxu0 0.0
        %1688 = vmatprep.subr.mxu0 0.0
        %1689 = vmatpush1.xpose.msra.mxu0 0.0
        %1690 = vmatprep.subr.mxu0 0.0
        %1691 = vmatpush1.xpose.msra.mxu0 0.0
        %1692 = vmatprep.subr.mxu0 0.0
        %1693 = vmatpush1.xpose.msra.mxu0 0.0
        %1694 = vmatprep.subr.mxu0 0.0
        %1695 = vmatpush1.xpose.msra.mxu0 0.0
        %1696 = vmatprep.subr.mxu0 0.0
        %1697 = vmatpush1.xpose.msra.mxu0 0.0
        %1698 = vmatprep.subr.mxu0 0.0
        %1699 = vmatpush1.xpose.msra.mxu0 0.0
        %1700 = vmatprep.subr.mxu0 0.0
        %1701 = vmatpush1.xpose.msra.mxu0 0.0
        %1702 = vmatprep.subr.mxu0 0.0
        %1703 = vmatpush1.xpose.msra.mxu0 0.0
        %1704 = vmatprep.subr.mxu0 0.0
        %1705 = vmatpush1.xpose.msra.mxu0 0.0
        %1706 = vmatprep.subr.mxu0 0.0
        %1707 = vmatpush1.xpose.msra.mxu0 %v1676
        %1708 = vmatprep.subr.mxu0 0.0
        %1709 = vmatpush1.xpose.msra.mxu0 %v1674
        %1710 = vmatprep.subr.mxu0 0.0
        %1711 = vmatpush2.xpose.msra.mxu0 0.0
        %1712 = vmatprep.subr.mxu0 0.0
        %1713 = vmatpush2.xpose.msra.mxu0 0.0
        %1714 = vmatprep.subr.mxu0 0.0
        %1715 = vmatpush2.xpose.msra.mxu0 0.0
        %1716 = vmatprep.subr.mxu0 0.0
        %1717 = vmatpush2.xpose.msra.mxu0 0.0
        %1718 = vmatprep.subr.mxu0 0.0
        %1719 = vmatpush2.xpose.msra.mxu0 0.0
        %1720 = vmatprep.subr.mxu0 0.0
        %1721 = vmatpush2.xpose.msra.mxu0 0.0
        %1722 = vmatprep.subr.mxu0 0.0
        %1723 = vmatpush2.xpose.msra.mxu0 0.0
        %1724 = vmatprep.subr.mxu0 0.0
        %1725 = vmatpush2.xpose.msra.mxu0 0.0
        %1726 = vmatprep.subr.mxu0 0.0
        %1727 = vmatpush2.xpose.msra.mxu0 0.0
        %1728 = vmatprep.subr.mxu0 0.0
        %1729 = vmatpush2.xpose.msra.mxu0 0.0
        %1730 = vmatprep.subr.mxu0 0.0
        %1731 = vmatpush2.xpose.msra.mxu0 0.0
        %1732 = vmatprep.subr.mxu0 0.0
        %1733 = vmatpush2.xpose.msra.mxu0 0.0
        %1734 = vmatprep.subr.mxu0 0.0
        %1735 = vmatpush2.xpose.msra.mxu0 0.0
        %1736 = vmatprep.subr.mxu0 0.0
        %1737 = vmatpush2.xpose.msra.mxu0 0.0
        %1738 = vmatprep.subr.mxu0 0.0
        %1739 = vmatpush2.xpose.msra.mxu0 0.0
        %1740 = vmatprep.subr.mxu0 0.0
        %1741 = vmatpush2.xpose.msra.mxu0 0.0
        %1742 = vmatprep.mubr.f32.mxu0 0.0
        %1743 = vmatmul.mubr.f32.gmra.mxu0 %v1672
        %v1744 = vpop.f32.mrf.mxu0
        %v1745 = vadd.f32 0.0, %v1744
        %v1746 = vpop.f32.mrf.mxu0
        %1747 = vdwg.mxu0
        %v1748 = vmul.f32 %v1745, 0.35355338
        %v1749 = vsel %vm1002, %v1748, -inf
        %1750 = vmax.xlane.f32.xlu0 %v1749
        %v1751 = vpop.xlane.xlu0 %1750
        %v1752 = vsub.f32 %v1748, %v1751
        %v1753 = vmul.f32 %v1752, 1.442695
        %v1754 = vpow.pop %v1753
        %v1755 = vsel %vm1002, %v1754, 0.0
        %1756 = vadd.xlane.f32.xlu0 %v1755
        %v1757 = vpop.xlane.xlu0 %1756
        %v1758 = vrcp.pop %v1757
        %v1759 = vmul.f32 %v1754, %v1758
        %1760 = vrot.lane.b32.xlu0 %v906, 72
        %v1761 = vpop.permute.xlu0 %1760
        %1762 = vrot.lane.b32.xlu0 %v911, 72
        %v1763 = vpop.permute.xlu0 %1762
        %v1767 = vsel %vm1002, %v1759, 0
        %1769 = vmatprep.subr.mxu0 0.0
        %1770 = vmatpush1.msra.mxu0 0.0
        %1771 = vmatprep.subr.mxu0 0.0
        %1772 = vmatpush1.msra.mxu0 0.0
        %1773 = vmatprep.subr.mxu0 0.0
        %1774 = vmatpush1.msra.mxu0 0.0
        %1775 = vmatprep.subr.mxu0 0.0
        %1776 = vmatpush1.msra.mxu0 0.0
        %1777 = vmatprep.subr.mxu0 0.0
        %1778 = vmatpush1.msra.mxu0 0.0
        %1779 = vmatprep.subr.mxu0 0.0
        %1780 = vmatpush1.msra.mxu0 0.0
        %1781 = vmatprep.subr.mxu0 0.0
        %1782 = vmatpush1.msra.mxu0 0.0
        %1783 = vmatprep.subr.mxu0 0.0
        %1784 = vmatpush1.msra.mxu0 0.0
        %1785 = vmatprep.subr.mxu0 0.0
        %1786 = vmatpush1.msra.mxu0 0.0
        %1787 = vmatprep.subr.mxu0 0.0
        %1788 = vmatpush1.msra.mxu0 0.0
        %1789 = vmatprep.subr.mxu0 0.0
        %1790 = vmatpush1.msra.mxu0 0.0
        %1791 = vmatprep.subr.mxu0 0.0
        %1792 = vmatpush1.msra.mxu0 0.0
        %1793 = vmatprep.subr.mxu0 0.0
        %1794 = vmatpush1.msra.mxu0 0.0
        %1795 = vmatprep.subr.mxu0 0.0
        %1796 = vmatpush1.msra.mxu0 0.0
        %1797 = vmatprep.subr.mxu0 0.0
        %1798 = vmatpush1.msra.mxu0 %v1763
        %1799 = vmatprep.subr.mxu0 0.0
        %1800 = vmatpush1.msra.mxu0 %v1761
        %1801 = vmatprep.subr.mxu0 0.0
        %1802 = vmatpush2.msra.mxu0 0.0
        %1803 = vmatprep.subr.mxu0 0.0
        %1804 = vmatpush2.msra.mxu0 0.0
        %1805 = vmatprep.subr.mxu0 0.0
        %1806 = vmatpush2.msra.mxu0 0.0
        %1807 = vmatprep.subr.mxu0 0.0
        %1808 = vmatpush2.msra.mxu0 0.0
        %1809 = vmatprep.subr.mxu0 0.0
        %1810 = vmatpush2.msra.mxu0 0.0
        %1811 = vmatprep.subr.mxu0 0.0
        %1812 = vmatpush2.msra.mxu0 0.0
        %1813 = vmatprep.subr.mxu0 0.0
        %1814 = vmatpush2.msra.mxu0 0.0
        %1815 = vmatprep.subr.mxu0 0.0
        %1816 = vmatpush2.msra.mxu0 0.0
        %1817 = vmatprep.subr.mxu0 0.0
        %1818 = vmatpush2.msra.mxu0 0.0
        %1819 = vmatprep.subr.mxu0 0.0
        %1820 = vmatpush2.msra.mxu0 0.0
        %1821 = vmatprep.subr.mxu0 0.0
        %1822 = vmatpush2.msra.mxu0 0.0
        %1823 = vmatprep.subr.mxu0 0.0
        %1824 = vmatpush2.msra.mxu0 0.0
        %1825 = vmatprep.subr.mxu0 0.0
        %1826 = vmatpush2.msra.mxu0 0.0
        %1827 = vmatprep.subr.mxu0 0.0
        %1828 = vmatpush2.msra.mxu0 0.0
        %1829 = vmatprep.subr.mxu0 0.0
        %1830 = vmatpush2.msra.mxu0 0.0
        %1831 = vmatprep.subr.mxu0 0.0
        %1832 = vmatpush2.msra.mxu0 0.0
        %1833 = vmatprep.mubr.f32.mxu0 0.0
        %1834 = vmatmul.mubr.f32.gmra.mxu0 %v1767
        %v1835 = vpop.f32.mrf.mxu0
        %v1836 = vadd.f32 0.0, %v1835
        %v1837 = vpop.f32.mrf.mxu0
        %1838 = vdwg.mxu0
        %s1839 = scalar_lea.vmem [#allocation7], 24
        %v1840 = vld [vmem:[%s1839] sm:$0xff]
        %v1842 = vsel %vm921, %v1836, 0
        %1844 = vmatprep.subr.mxu0 0.0
        %1845 = vmatpush1.msra.mxu0 0.0
        %1846 = vmatprep.subr.mxu0 0.0
        %1847 = vmatpush1.msra.mxu0 0.0
        %1848 = vmatprep.subr.mxu0 0.0
        %1849 = vmatpush1.msra.mxu0 0.0
        %1850 = vmatprep.subr.mxu0 0.0
        %1851 = vmatpush1.msra.mxu0 0.0
        %1852 = vmatprep.subr.mxu0 0.0
        %1853 = vmatpush1.msra.mxu0 0.0
        %1854 = vmatprep.subr.mxu0 0.0
        %1855 = vmatpush1.msra.mxu0 0.0
        %1856 = vmatprep.subr.mxu0 0.0
        %1857 = vmatpush1.msra.mxu0 0.0
        %1858 = vmatprep.subr.mxu0 0.0
        %1859 = vmatpush1.msra.mxu0 0.0
        %1860 = vmatprep.subr.mxu0 0.0
        %1861 = vmatpush1.msra.mxu0 0.0
        %1862 = vmatprep.subr.mxu0 0.0
        %1863 = vmatpush1.msra.mxu0 0.0
        %1864 = vmatprep.subr.mxu0 0.0
        %1865 = vmatpush1.msra.mxu0 0.0
        %1866 = vmatprep.subr.mxu0 0.0
        %1867 = vmatpush1.msra.mxu0 0.0
        %1868 = vmatprep.subr.mxu0 0.0
        %1869 = vmatpush1.msra.mxu0 0.0
        %1870 = vmatprep.subr.mxu0 0.0
        %1871 = vmatpush1.msra.mxu0 0.0
        %1872 = vmatprep.subr.mxu0 0.0
        %1873 = vmatpush1.msra.mxu0 0.0
        %1874 = vmatprep.subr.mxu0 0.0
        %1875 = vmatpush1.msra.mxu0 %v1840
        %1876 = vmatprep.subr.mxu0 0.0
        %1877 = vmatpush2.msra.mxu0 0.0
        %1878 = vmatprep.subr.mxu0 0.0
        %1879 = vmatpush2.msra.mxu0 0.0
        %1880 = vmatprep.subr.mxu0 0.0
        %1881 = vmatpush2.msra.mxu0 0.0
        %1882 = vmatprep.subr.mxu0 0.0
        %1883 = vmatpush2.msra.mxu0 0.0
        %1884 = vmatprep.subr.mxu0 0.0
        %1885 = vmatpush2.msra.mxu0 0.0
        %1886 = vmatprep.subr.mxu0 0.0
        %1887 = vmatpush2.msra.mxu0 0.0
        %1888 = vmatprep.subr.mxu0 0.0
        %1889 = vmatpush2.msra.mxu0 0.0
        %1890 = vmatprep.subr.mxu0 0.0
        %1891 = vmatpush2.msra.mxu0 0.0
        %1892 = vmatprep.subr.mxu0 0.0
        %1893 = vmatpush2.msra.mxu0 0.0
        %1894 = vmatprep.subr.mxu0 0.0
        %1895 = vmatpush2.msra.mxu0 0.0
        %1896 = vmatprep.subr.mxu0 0.0
        %1897 = vmatpush2.msra.mxu0 0.0
        %1898 = vmatprep.subr.mxu0 0.0
        %1899 = vmatpush2.msra.mxu0 0.0
        %1900 = vmatprep.subr.mxu0 0.0
        %1901 = vmatpush2.msra.mxu0 0.0
        %1902 = vmatprep.subr.mxu0 0.0
        %1903 = vmatpush2.msra.mxu0 0.0
        %1904 = vmatprep.subr.mxu0 0.0
        %1905 = vmatpush2.msra.mxu0 0.0
        %1906 = vmatprep.subr.mxu0 0.0
        %1907 = vmatpush2.msra.mxu0 0.0
        %1908 = vmatprep.mubr.f32.mxu0 0.0
        %1909 = vmatmul.mubr.f32.gmra.mxu0 %v1842
        %v1910 = vpop.f32.mrf.mxu0
        %v1911 = vadd.f32 0.0, %v1910
        %v1912 = vpop.f32.mrf.mxu0
        %1913 = vdwg.mxu0
        %v1914 = vadd.f32 %v1665, %v1911
        %1916 = vrot.lane.b32.xlu0 %v1914, 64
        %v1917 = vpop.permute.xlu0 %1916
        %v1919 = vmul.f32 %v703, %v1917
        %1921 = vrot.lane.b32.xlu0 %v1919, 64
        %v1922 = vpop.permute.xlu0 %1921
        %v1924 = vadd.f32 %v589, %v1922
        %v1925 = vsel %vm619, %v1924, 0.0
        %1926 = vadd.xlane.f32.xlu0 %v1925
        %v1927 = vpop.xlane.xlu0 %1926
        %v1928 = vmul.f32 %v1927, %v717
        %v1929 = vsub.f32 %v1924, %v1928
        %v1930 = vmul.f32 %v1929, %v1929
        %v1931 = vsel %vm619, %v1930, 0.0
        %1932 = vadd.xlane.f32.xlu0 %v1931
        %v1933 = vpop.xlane.xlu0 %1932
        %v1934 = vmul.f32 %v1933, %v717
        %v1935 = vadd.f32 %v1934, 1e-06
        %v1936 = vrsqrt.pop %v1935
        %v1937 = vmul.f32 %v1929, %v1936
        %1939 = vrot.lane.b32.xlu0 %v698, 32
        %v1940 = vpop.permute.xlu0 %1939
        %v1942 = vmul.f32 %v1937, %v1940
        %v1943 = vlaneseq
        %v1944 = vshrl.u32 %v1943, 7
        %v1945 = vsub.s32 0, %v1944
        %v1946 = vrot.slane %v692, %v1945
        %v1947 = vadd.f32 %v1942, %v1946
        %v1948 = vld [vmem:[#allocation8] sm:$0xff]
        %v1949 = vld [vmem:[#allocation8 + $0x8] sm:$0xff]
        %v1950 = vld [vmem:[#allocation8 + $0x10] sm:$0xff]
        %v1951 = vld [vmem:[#allocation8 + $0x18] sm:$0xff]
        %v1952 = vld [vmem:[%s13] sm:$0x1]
        %v1954 = vlaneseq
        %v1955 = vshrl.u32 %v1954, 7
        %v1956 = vsub.s32 0, %v1955
        %v1957 = vrot.slane %v1952, %v1956
        %v1960 = vsel %vm619, %v1947, 0
        %1962 = vmatprep.subr.mxu0 0.0
        %1963 = vmatpush1.msra.mxu0 0.0
        %1964 = vmatprep.subr.mxu0 0.0
        %1965 = vmatpush1.msra.mxu0 0.0
        %1966 = vmatprep.subr.mxu0 0.0
        %1967 = vmatpush1.msra.mxu0 0.0
        %1968 = vmatprep.subr.mxu0 0.0
        %1969 = vmatpush1.msra.mxu0 0.0
        %1970 = vmatprep.subr.mxu0 0.0
        %1971 = vmatpush1.msra.mxu0 0.0
        %1972 = vmatprep.subr.mxu0 0.0
        %1973 = vmatpush1.msra.mxu0 0.0
        %1974 = vmatprep.subr.mxu0 0.0
        %1975 = vmatpush1.msra.mxu0 0.0
        %1976 = vmatprep.subr.mxu0 0.0
        %1977 = vmatpush1.msra.mxu0 0.0
        %1978 = vmatprep.subr.mxu0 0.0
        %1979 = vmatpush1.msra.mxu0 0.0
        %1980 = vmatprep.subr.mxu0 0.0
        %1981 = vmatpush1.msra.mxu0 0.0
        %1982 = vmatprep.subr.mxu0 0.0
        %1983 = vmatpush1.msra.mxu0 0.0
        %1984 = vmatprep.subr.mxu0 0.0
        %1985 = vmatpush1.msra.mxu0 0.0
        %1986 = vmatprep.subr.mxu0 0.0
        %1987 = vmatpush1.msra.mxu0 %v1951
        %1988 = vmatprep.subr.mxu0 0.0
        %1989 = vmatpush1.msra.mxu0 %v1950
        %1990 = vmatprep.subr.mxu0 0.0
        %1991 = vmatpush1.msra.mxu0 %v1949
        %1992 = vmatprep.subr.mxu0 0.0
        %1993 = vmatpush1.msra.mxu0 %v1948
        %1994 = vmatprep.subr.mxu0 0.0
        %1995 = vmatpush2.msra.mxu0 0.0
        %1996 = vmatprep.subr.mxu0 0.0
        %1997 = vmatpush2.msra.mxu0 0.0
        %1998 = vmatprep.subr.mxu0 0.0
        %1999 = vmatpush2.msra.mxu0 0.0
        %2000 = vmatprep.subr.mxu0 0.0
        %2001 = vmatpush2.msra.mxu0 0.0
        %2002 = vmatprep.subr.mxu0 0.0
        %2003 = vmatpush2.msra.mxu0 0.0
        %2004 = vmatprep.subr.mxu0 0.0
        %2005 = vmatpush2.msra.mxu0 0.0
        %2006 = vmatprep.subr.mxu0 0.0
        %2007 = vmatpush2.msra.mxu0 0.0
        %2008 = vmatprep.subr.mxu0 0.0
        %2009 = vmatpush2.msra.mxu0 0.0
        %2010 = vmatprep.subr.mxu0 0.0
        %2011 = vmatpush2.msra.mxu0 0.0
        %2012 = vmatprep.subr.mxu0 0.0
        %2013 = vmatpush2.msra.mxu0 0.0
        %2014 = vmatprep.subr.mxu0 0.0
        %2015 = vmatpush2.msra.mxu0 0.0
        %2016 = vmatprep.subr.mxu0 0.0
        %2017 = vmatpush2.msra.mxu0 0.0
        %2018 = vmatprep.subr.mxu0 0.0
        %2019 = vmatpush2.msra.mxu0 0.0
        %2020 = vmatprep.subr.mxu0 0.0
        %2021 = vmatpush2.msra.mxu0 0.0
        %2022 = vmatprep.subr.mxu0 0.0
        %2023 = vmatpush2.msra.mxu0 0.0
        %2024 = vmatprep.subr.mxu0 0.0
        %2025 = vmatpush2.msra.mxu0 0.0
        %2026 = vmatprep.mubr.f32.mxu0 0.0
        %2027 = vmatmul.mubr.f32.gmra.mxu0 %v1960
        %v2028 = vpop.f32.mrf.mxu0
        %v2029 = vadd.f32 %v1957, %v2028
        %v2030 = vpop.f32.mrf.mxu0
        %2031 = vdwg.mxu0
        %v2032 = vmul.f32 %v2029, 0.5
        %v2033 = vmul.f32 %v2029, 0.044715
        %v2034 = vmul.f32 %v2033, %v2029
        %v2035 = vmul.f32 %v2034, %v2029
        %v2036 = vadd.f32 %v2029, %v2035
        %v2037 = vmul.f32 %v2036, 0.7978846
        %v2038 = vtanh.pop %v2037
        %v2039 = vadd.f32 %v2038, 1.0
        %v2040 = vmul.f32 %v2032, %v2039
        %v2041 = vld [vmem:[%s14] sm:$0xff]
        %v2042 = vld [vmem:[%s14 + $0x8] sm:$0xff]
        %v2043 = vld [vmem:[%s14 + $0x10] sm:$0xff]
        %v2044 = vld [vmem:[%s14 + $0x18] sm:$0xff]
        %v2045 = vld [vmem:[%s14 + $0x20] sm:$0xff]
        %v2046 = vld [vmem:[%s14 + $0x28] sm:$0xff]
        %v2047 = vld [vmem:[%s14 + $0x30] sm:$0xff]
        %v2048 = vld [vmem:[%s14 + $0x38] sm:$0xff]
        %v2049 = vld [vmem:[%s14 + $0x40] sm:$0xff]
        %v2050 = vld [vmem:[%s14 + $0x48] sm:$0xff]
        %v2051 = vld [vmem:[%s14 + $0x50] sm:$0xff]
        %v2052 = vld [vmem:[%s14 + $0x58] sm:$0xff]
        %v2053 = vld [vmem:[%s14 + $0x60] sm:$0xff]
        %v2054 = vld [vmem:[%s14 + $0x68] sm:$0xff]
        %v2055 = vld [vmem:[%s14 + $0x70] sm:$0xff]
        %v2056 = vld [vmem:[%s14 + $0x78] sm:$0xff]
        %v2057 = vld [vmem:[%s15] sm:$0x1]
        %v2059 = vlaneseq
        %v2060 = vshrl.u32 %v2059, 7
        %v2061 = vsub.s32 0, %v2060
        %v2062 = vrot.slane %v2057, %v2061
        %2064 = vmatprep.subr.mxu0 0.0
        %2065 = vmatpush1.msra.mxu0 %v2056
        %2066 = vmatprep.subr.mxu0 0.0
        %2067 = vmatpush1.msra.mxu0 %v2055
        %2068 = vmatprep.subr.mxu0 0.0
        %2069 = vmatpush1.msra.mxu0 %v2054
        %2070 = vmatprep.subr.mxu0 0.0
        %2071 = vmatpush1.msra.mxu0 %v2053
        %2072 = vmatprep.subr.mxu0 0.0
        %2073 = vmatpush1.msra.mxu0 %v2052
        %2074 = vmatprep.subr.mxu0 0.0
        %2075 = vmatpush1.msra.mxu0 %v2051
        %2076 = vmatprep.subr.mxu0 0.0
        %2077 = vmatpush1.msra.mxu0 %v2050
        %2078 = vmatprep.subr.mxu0 0.0
        %2079 = vmatpush1.msra.mxu0 %v2049
        %2080 = vmatprep.subr.mxu0 0.0
        %2081 = vmatpush1.msra.mxu0 %v2048
        %2082 = vmatprep.subr.mxu0 0.0
        %2083 = vmatpush1.msra.mxu0 %v2047
        %2084 = vmatprep.subr.mxu0 0.0
        %2085 = vmatpush1.msra.mxu0 %v2046
        %2086 = vmatprep.subr.mxu0 0.0
        %2087 = vmatpush1.msra.mxu0 %v2045
        %2088 = vmatprep.subr.mxu0 0.0
        %2089 = vmatpush1.msra.mxu0 %v2044
        %2090 = vmatprep.subr.mxu0 0.0
        %2091 = vmatpush1.msra.mxu0 %v2043
        %2092 = vmatprep.subr.mxu0 0.0
        %2093 = vmatpush1.msra.mxu0 %v2042
        %2094 = vmatprep.subr.mxu0 0.0
        %2095 = vmatpush1.msra.mxu0 %v2041
        %2096 = vmatprep.subr.mxu0 0.0
        %2097 = vmatpush2.msra.mxu0 0.0
        %2098 = vmatprep.subr.mxu0 0.0
        %2099 = vmatpush2.msra.mxu0 0.0
        %2100 = vmatprep.subr.mxu0 0.0
        %2101 = vmatpush2.msra.mxu0 0.0
        %2102 = vmatprep.subr.mxu0 0.0
        %2103 = vmatpush2.msra.mxu0 0.0
        %2104 = vmatprep.subr.mxu0 0.0
        %2105 = vmatpush2.msra.mxu0 0.0
        %2106 = vmatprep.subr.mxu0 0.0
        %2107 = vmatpush2.msra.mxu0 0.0
        %2108 = vmatprep.subr.mxu0 0.0
        %2109 = vmatpush2.msra.mxu0 0.0
        %2110 = vmatprep.subr.mxu0 0.0
        %2111 = vmatpush2.msra.mxu0 0.0
        %2112 = vmatprep.subr.mxu0 0.0
        %2113 = vmatpush2.msra.mxu0 0.0
        %2114 = vmatprep.subr.mxu0 0.0
        %2115 = vmatpush2.msra.mxu0 0.0
        %2116 = vmatprep.subr.mxu0 0.0
        %2117 = vmatpush2.msra.mxu0 0.0
        %2118 = vmatprep.subr.mxu0 0.0
        %2119 = vmatpush2.msra.mxu0 0.0
        %2120 = vmatprep.subr.mxu0 0.0
        %2121 = vmatpush2.msra.mxu0 0.0
        %2122 = vmatprep.subr.mxu0 0.0
        %2123 = vmatpush2.msra.mxu0 0.0
        %2124 = vmatprep.subr.mxu0 0.0
        %2125 = vmatpush2.msra.mxu0 0.0
        %2126 = vmatprep.subr.mxu0 0.0
        %2127 = vmatpush2.msra.mxu0 0.0
        %2128 = vmatprep.mubr.f32.mxu0 0.0
        %2129 = vmatmul.mubr.f32.gmra.mxu0 %v2040
        %v2130 = vpop.f32.mrf.mxu0
        %v2131 = vadd.f32 %v2062, %v2130
        %v2132 = vpop.f32.mrf.mxu0
        %2133 = vdwg.mxu0
        %2135 = vrot.lane.b32.xlu0 %v2131, 32
        %v2136 = vpop.permute.xlu0 %2135
        %v2138 = vmul.f32 %v1946, %v2136
        %2140 = vrot.lane.b32.xlu0 %v2138, 96
        %v2141 = vpop.permute.xlu0 %2140
        %v2143 = vadd.f32 %v1924, %v2141
        %2144 = vst.msk [vmem:[%s580] sm:$0xff] %vm619, %v2143
        %s2145 = sand.u32 %s387, 1
        %s2146 = scalar_lea.sflag [#allocation4], %s2145
        %s2147 = sand.u32 %s387, 1
        %s2148 = smul.addr %s2147, 8
        %s2149 = scalar_lea.vmem [#allocation10], %s2148
        // Predicated region
        $region101: #{tpu_custom_call.1} parent=83 // pred_check
          %p2150 = pneg %p397
        $region102: #{tpu_custom_call.1} parent=83 // pred_check_branch
          %2152 = sbr.rel (%p2150) target = $region104
        $region103: #{tpu_custom_call.1} parent=83 // pred_region
          %s2154 = ssub.s32 128, 128
          %2155 = vsyncadd %s2146, %s2154
          %s2156 = smul.addr %s33, 128
          %s2157 = scalar_lea.hbm %s16, %s2156
          %s2159 = sshll.u32 %s2149, 4
          %s2160 = int_to_ptr.vmem [resolvable:$true] %s2159
          %2162 = dma.vmem_to_hbm [thread:$0]  %s2160, 128, %s2157, %s2146
        $region104: #{tpu_custom_call.1} parent=83 // pred_fallthru
          _
      $region84: #{tpu_custom_call.1} parent=5 // pred_fallthru
        _
      %p2163 = scmp.le.s32.totalorder 2, %s28
      // Predicated region
      $region105: #{tpu_custom_call.1} parent=5 // pred_check
        %p2164 = pneg %p2163
      $region106: #{tpu_custom_call.1} parent=5 // pred_check_branch
        %2166 = sbr.rel (%p2164) target = $region108
      $region107: #{tpu_custom_call.1} parent=5 // pred_region
        %s2167 = ssub.s32 %s28, 2
        // Predicated region
        $region109: #{tpu_custom_call.1} parent=107 // pred_check
          %p2168 = pneg %p403
        $region110: #{tpu_custom_call.1} parent=107 // pred_check_branch
          %2170 = sbr.rel (%p2168) target = $region112
        $region111: #{tpu_custom_call.1} parent=107 // pred_region
          %s2171 = sand.u32 %s388, 1
          %s2172 = scalar_lea.sflag [#allocation4], %s2171
          %s2173 = sand.u32 %s388, 1
          %s2174 = smul.addr %s2173, 8
          %s2175 = scalar_lea.vmem [#allocation10], %s2174
          %2176 = dma.done %s2172, 128
        $region112: #{tpu_custom_call.1} parent=107 // pred_fallthru
          _
      $region108: #{tpu_custom_call.1} parent=5 // pred_fallthru
        _
    $region6: #{tpu_custom_call.1} parent=1 // loop_footer
      %s32 = sadd.s32 1, %s28
    $region7: #{tpu_custom_call.1} parent=1 // loop_footer_branch
      %27 = sbr.rel target = $region3
    $region8: #{tpu_custom_call.1} parent=1 // loop_exit
      _
    %2177 = vsyncpa [#allocation3], 1
    %s2178 = scalar_lea.sflag [#allocation3], 1
    %2179 = vsyncpa %s2178, 1
    %2180 = vsyncpa [#allocation6], 1
    %2181 = vsyncpa [#allocation9], 1
    %2182 = vsyncpa [#allocation4], 1
    %s2183 = scalar_lea.sflag [#allocation4], 1
    %2184 = vsyncpa %s2183, 1

</llo_original>
